<compile_context>
chip_gen: v7x
topology: tpu7x:2x2x1
jax: 0.10.0
libtpu: 0.0.40
codegen_flags: <defaults>
</compile_context>

<pallas_src>
import functools

import jax
import jax.numpy as jnp
from jax import lax
from jax.experimental import pallas as pl
from jax.experimental.pallas import tpu as pltpu


def _clip_ce_kernel(scale_ref, img_ref, txt_col_ref, txt_row_ref, tpos_ref,
                    ipos_ref, loss_ref, acc_ref, m_row_ref, l_row_ref,
                    m_col_ref, l_col_ref, *, inv_2n):
    # scale_ref   : SMEM (1, 1) f32                        logit_scale
    # img_ref     : VMEM (tm, D)   image features, row block i
    # txt_col_ref : VMEM (tn, D)   text  features, column block j
    # txt_row_ref : VMEM (tm, D)   text  features, row block i   (text positives)
    # tpos_ref    : VMEM (tm, D)   txt[labels],    row block i   (image positives)
    # ipos_ref    : VMEM (tm, D)   img[labels],    row block i   (text positives)
    # loss_ref    : VMEM (1, 1) f32 output
    # acc_ref     : VMEM (1, 1) f32 running loss sum
    # m_row/l_row : VMEM (tm, 1)     row-direction online-LSE state
    # m_col/l_col : VMEM (nj, 1, tn) column-direction online-LSE state
    i = pl.program_id(0)
    j = pl.program_id(1)
    ni = pl.num_programs(0)
    nj = pl.num_programs(1)

    scale = scale_ref[0, 0]

    # ---- one-time init (first grid step) -------------------------------------
    @pl.when((i == 0) & (j == 0))
    def _():
        acc_ref[...] = jnp.zeros_like(acc_ref)
        m_col_ref[...] = jnp.full(m_col_ref.shape, -jnp.inf, jnp.float32)
        l_col_ref[...] = jnp.zeros(l_col_ref.shape, jnp.float32)

    # ---- per-row-block init + direct positive-pair logits --------------------
    @pl.when(j == 0)
    def _():
        m_row_ref[...] = jnp.full(m_row_ref.shape, -jnp.inf, jnp.float32)
        l_row_ref[...] = jnp.zeros(l_row_ref.shape, jnp.float32)
        # O(tm * D): replaces an N x N eye-mask diagonal extraction.
        img_f = img_ref[...].astype(jnp.float32)
        tpos_f = tpos_ref[...].astype(jnp.float32)
        trow_f = txt_row_ref[...].astype(jnp.float32)
        ipos_f = ipos_ref[...].astype(jnp.float32)
        pos = jnp.sum(img_f * tpos_f + trow_f * ipos_f, keepdims=True)  # (1, 1)
        acc_ref[...] += (-inv_2n) * scale * pos

    # ---- similarity tile on the MXU (contract last dims, no transpose) -------
    s = lax.dot_general(
        img_ref[...], txt_col_ref[...],
        dimension_numbers=(((1,), (1,)), ((), ())),
        preferred_element_type=jnp.float32) * scale                # (tm, tn)

    # ---- row-direction (image loss) stable online LSE ------------------------
    m_prev = m_row_ref[...]                                        # (tm, 1)
    m_new = jnp.maximum(m_prev, jnp.max(s, axis=1, keepdims=True))
    p_row = jnp.exp(s - m_new)                                     # (tm, tn)
    l_row_ref[...] = (l_row_ref[...] * jnp.exp(m_prev - m_new)
                      + jnp.sum(p_row, axis=1, keepdims=True))
    m_row_ref[...] = m_new

    # ---- column-direction (text loss) stable online LSE ----------------------
    c_prev = m_col_ref[j]                                          # (1, tn)
    c_new = jnp.maximum(c_prev, jnp.max(s, axis=0, keepdims=True))
    p_col = jnp.exp(s - c_new)                                     # (tm, tn)
    # Column sum on the MXU (ones-row matmul) to keep it off the XLU path.
    ones_row = jnp.ones((1, s.shape[0]), jnp.float32)
    col_sum = lax.dot_general(
        ones_row, p_col,
        dimension_numbers=(((1,), (0,)), ((), ())),
        preferred_element_type=jnp.float32)                        # (1, tn)
    l_col_ref[j] = l_col_ref[j] * jnp.exp(c_prev - c_new) + col_sum
    m_col_ref[j] = c_new

    # ---- finalize this row block (image-side loss terms) ---------------------
    @pl.when(j == nj - 1)
    def _():
        row_lse = m_row_ref[...] + jnp.log(l_row_ref[...])         # (tm, 1)
        acc_ref[...] += inv_2n * jnp.sum(row_lse, keepdims=True)

    # ---- finalize this column block (text-side loss terms) -------------------
    @pl.when(i == ni - 1)
    def _():
        col_lse = m_col_ref[j] + jnp.log(l_col_ref[j])             # (1, tn)
        acc_ref[...] += inv_2n * jnp.sum(col_lse, keepdims=True)

    # ---- emit the scalar loss on the last grid step --------------------------
    @pl.when((i == ni - 1) & (j == nj - 1))
    def _():
        loss_ref[...] = acc_ref[...]


def cross_entropy_loss(all_image_features, all_text_features, logit_scale,
                       labels, *, block_m=128, block_n=128):
    """Pallas implementation of Cross_Entropy_Loss.forward."""
    n, d = all_image_features.shape
    assert all_text_features.shape == (n, d)
    labels = jnp.asarray(labels, dtype=jnp.int32)
    assert labels.shape == (n,)

    # 128-multiple tiles feed v5e/v6e/v7x MXUs; fall back to one block if N is
    # not divisible (the block then equals the full dim, which Pallas allows).
    tm = block_m if (n >= block_m and n % block_m == 0) else n
    tn = block_n if (n >= block_n and n % block_n == 0) else n
    ni, nj = n // tm, n // tn

    img = all_image_features
    txt = all_text_features
    # Gathered positive partners (general integer labels, as in F.cross_entropy).
    txt_pos = jnp.take(txt, labels, axis=0)   # (n, d)
    img_pos = jnp.take(img, labels, axis=0)   # (n, d)

    scale_arr = jnp.asarray(logit_scale, dtype=jnp.float32).reshape(1, 1)

    feat_bytes = jnp.dtype(img.dtype).itemsize
    cost = pl.CostEstimate(
        flops=2 * n * n * d + 10 * n * n + 4 * n * d,
        transcendentals=2 * n * n + 4 * n,
        bytes_accessed=feat_bytes * (ni * n * d + 4 * n * d) + 8,
    )

    kernel = functools.partial(_clip_ce_kernel, inv_2n=float(0.5 / n))

    loss = pl.pallas_call(
        kernel,
        out_shape=jax.ShapeDtypeStruct((1, 1), jnp.float32),
        grid=(ni, nj),
        in_specs=[
            pl.BlockSpec(memory_space=pltpu.SMEM),             # logit_scale
            pl.BlockSpec((tm, d), lambda i, j: (i, 0)),        # img, row block
            pl.BlockSpec((tn, d), lambda i, j: (j, 0)),        # txt, column block
            pl.BlockSpec((tm, d), lambda i, j: (i, 0)),        # txt, row block
            pl.BlockSpec((tm, d), lambda i, j: (i, 0)),        # txt[labels], row block
            pl.BlockSpec((tm, d), lambda i, j: (i, 0)),        # img[labels], row block
        ],
        out_specs=pl.BlockSpec((1, 1), lambda i, j: (0, 0)),
        scratch_shapes=[
            pltpu.VMEM((1, 1), jnp.float32),                   # running loss sum
            pltpu.VMEM((tm, 1), jnp.float32),                  # row running max
            pltpu.VMEM((tm, 1), jnp.float32),                  # row running sum-exp
            pltpu.VMEM((nj, 1, tn), jnp.float32),              # col running max
            pltpu.VMEM((nj, 1, tn), jnp.float32),              # col running sum-exp
        ],
        compiler_params=pltpu.CompilerParams(
            # Both axes carry accumulator state (row LSE over j, col LSE over i),
            # so neither can be megacore-sharded.
            dimension_semantics=("arbitrary", "arbitrary")),
        cost_estimate=cost,
    )(scale_arr, img, txt, txt, txt_pos, img_pos)

    return {"cross_entropy_loss": loss[0, 0]}


def _reference(img, txt, scale, labels):
    # Pure-JAX reference mirroring the PyTorch module (F.cross_entropy is a
    # stable log-softmax + NLL with mean reduction).
    lpi = scale * jnp.matmul(img, txt.T, precision=lax.Precision.HIGHEST)
    lpt = scale * jnp.matmul(txt, img.T, precision=lax.Precision.HIGHEST)

    def ce(logits, lbl):
        logp = jax.nn.log_softmax(logits, axis=-1)
        return -jnp.mean(jnp.take_along_axis(logp, lbl[:, None], axis=1))

    return (ce(lpi, labels) + ce(lpt, labels)) / 2.0


if __name__ == "__main__":
    key = jax.random.PRNGKey(0)
    k_img, k_txt, k_lab = jax.random.split(key, 3)

    N, D = 256, 64
    img = jax.random.normal(k_img, (N, D), dtype=jnp.float32)
    txt = jax.random.normal(k_txt, (N, D), dtype=jnp.float32)
    # CLIP-style unit-normalized features; snap to the bf16 grid so the
    # reference matmul and the in-kernel MXU matmul agree to f32 accumulation
    # error regardless of XLA's default matmul precision.
    img = img / jnp.linalg.norm(img, axis=-1, keepdims=True)
    txt = txt / jnp.linalg.norm(txt, axis=-1, keepdims=True)
    img = img.astype(jnp.bfloat16).astype(jnp.float32)
    txt = txt.astype(jnp.bfloat16).astype(jnp.float32)

    # Large logit scale exercises the stable (max-subtracted) LSE path.
    logit_scale = jnp.float32(100.0)
    labels = jax.random.permutation(k_lab, N).astype(jnp.int32)

    out = cross_entropy_loss(img, txt, logit_scale, labels)
    loss = jax.block_until_ready(out["cross_entropy_loss"])

    ref = _reference(img, txt, logit_scale, labels)
    assert jnp.isfinite(loss), loss
    assert jnp.allclose(loss, ref, atol=1e-2, rtol=1e-3), (loss, ref)

    print("KERNEL_OK")
</pallas_src>

<mosaic_0001>
module attributes {stable_mosaic.version = 11 : i64} {
  func.func @_clip_ce_kernel(%arg0: i32, %arg1: i32, %arg2: memref<1x1xf32, #tpu.memory_space<smem>>, %arg3: memref<128x64xf32, #tpu.memory_space<vmem>>, %arg4: memref<128x64xf32, #tpu.memory_space<vmem>>, %arg5: memref<128x64xf32, #tpu.memory_space<vmem>>, %arg6: memref<128x64xf32, #tpu.memory_space<vmem>>, %arg7: memref<128x64xf32, #tpu.memory_space<vmem>>, %arg8: memref<1x1xf32, #tpu.memory_space<vmem>>, %arg9: memref<1x1xf32, #tpu.memory_space<vmem>>, %arg10: memref<128x1xf32, #tpu.memory_space<vmem>>, %arg11: memref<128x1xf32, #tpu.memory_space<vmem>>, %arg12: memref<2x1x128xf32, #tpu.memory_space<vmem>>, %arg13: memref<2x1x128xf32, #tpu.memory_space<vmem>>) attributes {dimension_semantics = [#tpu.dimension_semantics<arbitrary>, #tpu.dimension_semantics<arbitrary>], iteration_bounds = array<i64: 2, 2>, scalar_prefetch = 0 : i64, scratch_operands = 5 : i64, tpu.core_type = #tpu.core_type<tc>, window_params = [{transform_indices = @transform_0, window_bounds = array<i64: 1, 1>}, {transform_indices = @transform_1, window_bounds = array<i64: 128, 64>}, {transform_indices = @transform_2, window_bounds = array<i64: 128, 64>}, {transform_indices = @transform_3, window_bounds = array<i64: 128, 64>}, {transform_indices = @transform_4, window_bounds = array<i64: 128, 64>}, {transform_indices = @transform_5, window_bounds = array<i64: 128, 64>}, {pipeline_mode = #tpu.pipeline_mode<synchronous>, transform_indices = @transform_6, window_bounds = array<i64: 1, 1>}]} {
    %c0 = arith.constant 0 : index
    %c0_0 = arith.constant 0 : index
    %0 = memref.load %arg2[%c0, %c0_0] : memref<1x1xf32, #tpu.memory_space<smem>>
    %c0_i32 = arith.constant 0 : i32
    %1 = arith.cmpi eq, %arg0, %c0_i32 : i32
    %c0_i32_1 = arith.constant 0 : i32
    %2 = arith.cmpi eq, %arg1, %c0_i32_1 : i32
    %3 = arith.andi %1, %2 : i1
    %4 = arith.extui %3 : i1 to i32
    %c0_i32_2 = arith.constant 0 : i32
    %5 = arith.cmpi ne, %4, %c0_i32_2 : i32
    scf.if %5 {
      %cst_36 = arith.constant 0.000000e+00 : f32
      %67 = vector.broadcast %cst_36 : f32 to vector<1x1xf32>
      %c0_37 = arith.constant 0 : index
      %c0_38 = arith.constant 0 : index
      %68 = vector.load %arg9[%c0_37, %c0_38] : memref<1x1xf32, #tpu.memory_space<vmem>>, vector<1x1xf32>
      tpu.vector_store %arg9[%c0_37, %c0_38], %67 {strides = array<i32>} : memref<1x1xf32, #tpu.memory_space<vmem>>, vector<1x1xf32>,
      %cst_39 = arith.constant 0xFF800000 : f32
      %69 = vector.broadcast %cst_39 : f32 to vector<2x1x128xf32>
      %c0_40 = arith.constant 0 : index
      %c0_41 = arith.constant 0 : index
      %c0_42 = arith.constant 0 : index
      %70 = vector.load %arg12[%c0_40, %c0_41, %c0_42] : memref<2x1x128xf32, #tpu.memory_space<vmem>>, vector<2x1x128xf32>
      tpu.vector_store %arg12[%c0_40, %c0_41, %c0_42], %69 {strides = array<i32>} : memref<2x1x128xf32, #tpu.memory_space<vmem>>, vector<2x1x128xf32>,
      %cst_43 = arith.constant 0.000000e+00 : f32
      %71 = vector.broadcast %cst_43 : f32 to vector<2x1x128xf32>
      %c0_44 = arith.constant 0 : index
      %c0_45 = arith.constant 0 : index
      %c0_46 = arith.constant 0 : index
      %72 = vector.load %arg13[%c0_44, %c0_45, %c0_46] : memref<2x1x128xf32, #tpu.memory_space<vmem>>, vector<2x1x128xf32>
      tpu.vector_store %arg13[%c0_44, %c0_45, %c0_46], %71 {strides = array<i32>} : memref<2x1x128xf32, #tpu.memory_space<vmem>>, vector<2x1x128xf32>,
    } else {
    }
    %c0_i32_3 = arith.constant 0 : i32
    %6 = arith.cmpi eq, %arg1, %c0_i32_3 : i32
    %7 = arith.extui %6 : i1 to i32
    %c0_i32_4 = arith.constant 0 : i32
    %8 = arith.cmpi ne, %7, %c0_i32_4 : i32
    scf.if %8 {
      %cst_36 = arith.constant 0xFF800000 : f32
      %67 = vector.broadcast %cst_36 : f32 to vector<128x1xf32>
      %c0_37 = arith.constant 0 : index
      %c0_38 = arith.constant 0 : index
      %68 = vector.load %arg10[%c0_37, %c0_38] : memref<128x1xf32, #tpu.memory_space<vmem>>, vector<128x1xf32>
      tpu.vector_store %arg10[%c0_37, %c0_38], %67 {strides = array<i32>} : memref<128x1xf32, #tpu.memory_space<vmem>>, vector<128x1xf32>,
      %cst_39 = arith.constant 0.000000e+00 : f32
      %69 = vector.broadcast %cst_39 : f32 to vector<128x1xf32>
      %c0_40 = arith.constant 0 : index
      %c0_41 = arith.constant 0 : index
      %70 = vector.load %arg11[%c0_40, %c0_41] : memref<128x1xf32, #tpu.memory_space<vmem>>, vector<128x1xf32>
      tpu.vector_store %arg11[%c0_40, %c0_41], %69 {strides = array<i32>} : memref<128x1xf32, #tpu.memory_space<vmem>>, vector<128x1xf32>,
      %c0_42 = arith.constant 0 : index
      %c0_43 = arith.constant 0 : index
      %71 = vector.load %arg3[%c0_42, %c0_43] : memref<128x64xf32, #tpu.memory_space<vmem>>, vector<128x64xf32>
      %c0_44 = arith.constant 0 : index
      %c0_45 = arith.constant 0 : index
      %72 = vector.load %arg6[%c0_44, %c0_45] : memref<128x64xf32, #tpu.memory_space<vmem>>, vector<128x64xf32>
      %c0_46 = arith.constant 0 : index
      %c0_47 = arith.constant 0 : index
      %73 = vector.load %arg5[%c0_46, %c0_47] : memref<128x64xf32, #tpu.memory_space<vmem>>, vector<128x64xf32>
      %c0_48 = arith.constant 0 : index
      %c0_49 = arith.constant 0 : index
      %74 = vector.load %arg7[%c0_48, %c0_49] : memref<128x64xf32, #tpu.memory_space<vmem>>, vector<128x64xf32>
      %75 = arith.mulf %71, %72 : vector<128x64xf32>
      %76 = arith.mulf %73, %74 : vector<128x64xf32>
      %77 = arith.addf %75, %76 : vector<128x64xf32>
      %78 = vector.shape_cast %77 : vector<128x64xf32> to vector<1x128x64xf32>
      %cst_50 = arith.constant dense<0.000000e+00> : vector<1xf32>
      %79 = vector.multi_reduction <add>, %78, %cst_50 [1, 2] : vector<1x128x64xf32> to vector<1xf32>
      %80 = vector.shape_cast %79 : vector<1xf32> to vector<1x1x1xf32>
      %81 = vector.extract %80[0, 0, 0] : f32 from vector<1x1x1xf32>
      %82 = vector.broadcast %81 : f32 to vector<1x1xf32>
      %c0_51 = arith.constant 0 : index
      %c0_52 = arith.constant 0 : index
      %83 = vector.load %arg9[%c0_51, %c0_52] : memref<1x1xf32, #tpu.memory_space<vmem>>, vector<1x1xf32>
      %cst_53 = arith.constant -0.001953125 : f32
      %84 = arith.mulf %cst_53, %0 : f32
      %85 = vector.broadcast %84 : f32 to vector<1x1xf32>
      %86 = arith.mulf %85, %82 : vector<1x1xf32>
      %87 = arith.addf %83, %86 : vector<1x1xf32>
      %c0_54 = arith.constant 0 : index
      %c0_55 = arith.constant 0 : index
      %88 = vector.load %arg9[%c0_54, %c0_55] : memref<1x1xf32, #tpu.memory_space<vmem>>, vector<1x1xf32>
      tpu.vector_store %arg9[%c0_54, %c0_55], %87 {strides = array<i32>} : memref<1x1xf32, #tpu.memory_space<vmem>>, vector<1x1xf32>,
    } else {
    }
    %c0_5 = arith.constant 0 : index
    %c0_6 = arith.constant 0 : index
    %9 = vector.load %arg3[%c0_5, %c0_6] : memref<128x64xf32, #tpu.memory_space<vmem>>, vector<128x64xf32>
    %c0_7 = arith.constant 0 : index
    %c0_8 = arith.constant 0 : index
    %10 = vector.load %arg4[%c0_7, %c0_8] : memref<128x64xf32, #tpu.memory_space<vmem>>, vector<128x64xf32>
    %cst = arith.constant dense<0.000000e+00> : vector<128x128xf32>
    %11 = tpu.matmul %9, %10, %cst {dimension_numbers = #tpu.dot_dimension_numbers<[1], [1], [0], [0], [0, 0, 1, 0], [], []>} : vector<128x64xf32>, vector<128x64xf32>, vector<128x128xf32> -> vector<128x128xf32>
    %12 = vector.broadcast %0 : f32 to vector<128x128xf32>
    %13 = arith.mulf %11, %12 : vector<128x128xf32>
    %c0_9 = arith.constant 0 : index
    %c0_10 = arith.constant 0 : index
    %14 = vector.load %arg10[%c0_9, %c0_10] : memref<128x1xf32, #tpu.memory_space<vmem>>, vector<128x1xf32>
    %cst_11 = arith.constant dense<0xFF800000> : vector<128xf32>
    %15 = vector.multi_reduction <maximumf>, %13, %cst_11 [1] : vector<128x128xf32> to vector<128xf32>
    %16 = vector.shape_cast %15 : vector<128xf32> to vector<128x1xf32>
    %17 = arith.maximumf %14, %16 : vector<128x1xf32>
    %18 = vector.broadcast %17 : vector<128x1xf32> to vector<128x128xf32>
    %19 = arith.subf %13, %18 : vector<128x128xf32>
    %20 = math.exp %19 : vector<128x128xf32>
    %c0_12 = arith.constant 0 : index
    %c0_13 = arith.constant 0 : index
    %21 = vector.load %arg11[%c0_12, %c0_13] : memref<128x1xf32, #tpu.memory_space<vmem>>, vector<128x1xf32>
    %22 = arith.subf %14, %17 : vector<128x1xf32>
    %23 = math.exp %22 : vector<128x1xf32>
    %24 = arith.mulf %21, %23 : vector<128x1xf32>
    %cst_14 = arith.constant dense<0.000000e+00> : vector<128xf32>
    %25 = vector.multi_reduction <add>, %20, %cst_14 [1] : vector<128x128xf32> to vector<128xf32>
    %26 = vector.shape_cast %25 : vector<128xf32> to vector<128x1xf32>
    %27 = arith.addf %24, %26 : vector<128x1xf32>
    %c0_15 = arith.constant 0 : index
    %c0_16 = arith.constant 0 : index
    %28 = vector.load %arg11[%c0_15, %c0_16] : memref<128x1xf32, #tpu.memory_space<vmem>>, vector<128x1xf32>
    tpu.vector_store %arg11[%c0_15, %c0_16], %27 {strides = array<i32>} : memref<128x1xf32, #tpu.memory_space<vmem>>, vector<128x1xf32>,
    %c0_17 = arith.constant 0 : index
    %c0_18 = arith.constant 0 : index
    %29 = vector.load %arg10[%c0_17, %c0_18] : memref<128x1xf32, #tpu.memory_space<vmem>>, vector<128x1xf32>
    tpu.vector_store %arg10[%c0_17, %c0_18], %17 {strides = array<i32>} : memref<128x1xf32, #tpu.memory_space<vmem>>, vector<128x1xf32>,
    %30 = arith.index_cast %arg1 : i32 to index
    %c0_19 = arith.constant 0 : index
    %c0_20 = arith.constant 0 : index
    %31 = vector.load %arg12[%30, %c0_19, %c0_20] : memref<2x1x128xf32, #tpu.memory_space<vmem>>, vector<1x1x128xf32>
    %32 = vector.shape_cast %31 : vector<1x1x128xf32> to vector<1x128xf32>
    %cst_21 = arith.constant dense<0xFF800000> : vector<128xf32>
    %33 = vector.multi_reduction <maximumf>, %13, %cst_21 [0] : vector<128x128xf32> to vector<128xf32>
    %34 = vector.shape_cast %33 : vector<128xf32> to vector<1x128xf32>
    %35 = arith.maximumf %32, %34 : vector<1x128xf32>
    %36 = vector.broadcast %35 : vector<1x128xf32> to vector<128x128xf32>
    %37 = arith.subf %13, %36 : vector<128x128xf32>
    %38 = math.exp %37 : vector<128x128xf32>
    %cst_22 = arith.constant 1.000000e+00 : f32
    %39 = vector.broadcast %cst_22 : f32 to vector<1x128xf32>
    %cst_23 = arith.constant dense<0.000000e+00> : vector<1x128xf32>
    %40 = tpu.matmul %39, %38, %cst_23 {dimension_numbers = #tpu.dot_dimension_numbers<[1], [0], [0], [1], [0, 0, 1, 1], [], []>} : vector<1x128xf32>, vector<128x128xf32>, vector<1x128xf32> -> vector<1x128xf32>
    %41 = arith.index_cast %arg1 : i32 to index
    %c0_24 = arith.constant 0 : index
    %c0_25 = arith.constant 0 : index
    %42 = vector.load %arg13[%41, %c0_24, %c0_25] : memref<2x1x128xf32, #tpu.memory_space<vmem>>, vector<1x1x128xf32>
    %43 = vector.shape_cast %42 : vector<1x1x128xf32> to vector<1x128xf32>
    %44 = arith.subf %32, %35 : vector<1x128xf32>
    %45 = math.exp %44 : vector<1x128xf32>
    %46 = arith.mulf %43, %45 : vector<1x128xf32>
    %47 = arith.addf %46, %40 : vector<1x128xf32>
    %48 = arith.index_cast %arg1 : i32 to index
    %c0_26 = arith.constant 0 : index
    %c0_27 = arith.constant 0 : index
    %49 = vector.load %arg13[%48, %c0_26, %c0_27] : memref<2x1x128xf32, #tpu.memory_space<vmem>>, vector<1x1x128xf32>
    %50 = vector.shape_cast %49 : vector<1x1x128xf32> to vector<1x128xf32>
    %51 = vector.shape_cast %47 : vector<1x128xf32> to vector<1x1x128xf32>
    tpu.vector_store %arg13[%48, %c0_26, %c0_27], %51 {strides = array<i32>} : memref<2x1x128xf32, #tpu.memory_space<vmem>>, vector<1x1x128xf32>,
    %52 = arith.index_cast %arg1 : i32 to index
    %c0_28 = arith.constant 0 : index
    %c0_29 = arith.constant 0 : index
    %53 = vector.load %arg12[%52, %c0_28, %c0_29] : memref<2x1x128xf32, #tpu.memory_space<vmem>>, vector<1x1x128xf32>
    %54 = vector.shape_cast %53 : vector<1x1x128xf32> to vector<1x128xf32>
    %55 = vector.shape_cast %35 : vector<1x128xf32> to vector<1x1x128xf32>
    tpu.vector_store %arg12[%52, %c0_28, %c0_29], %55 {strides = array<i32>} : memref<2x1x128xf32, #tpu.memory_space<vmem>>, vector<1x1x128xf32>,
    %c1_i32 = arith.constant 1 : i32
    %56 = arith.cmpi eq, %arg1, %c1_i32 : i32
    %57 = arith.extui %56 : i1 to i32
    %c0_i32_30 = arith.constant 0 : i32
    %58 = arith.cmpi ne, %57, %c0_i32_30 : i32
    scf.if %58 {
      %c0_36 = arith.constant 0 : index
      %c0_37 = arith.constant 0 : index
      %67 = vector.load %arg10[%c0_36, %c0_37] : memref<128x1xf32, #tpu.memory_space<vmem>>, vector<128x1xf32>
      %c0_38 = arith.constant 0 : index
      %c0_39 = arith.constant 0 : index
      %68 = vector.load %arg11[%c0_38, %c0_39] : memref<128x1xf32, #tpu.memory_space<vmem>>, vector<128x1xf32>
      %69 = math.log %68 : vector<128x1xf32>
      %70 = arith.addf %67, %69 : vector<128x1xf32>
      %c0_40 = arith.constant 0 : index
      %c0_41 = arith.constant 0 : index
      %71 = vector.load %arg9[%c0_40, %c0_41] : memref<1x1xf32, #tpu.memory_space<vmem>>, vector<1x1xf32>
      %72 = vector.shape_cast %70 : vector<128x1xf32> to vector<1x128x1xf32>
      %cst_42 = arith.constant dense<0.000000e+00> : vector<1xf32>
      %73 = vector.multi_reduction <add>, %72, %cst_42 [1, 2] : vector<1x128x1xf32> to vector<1xf32>
      %74 = vector.shape_cast %73 : vector<1xf32> to vector<1x1x1xf32>
      %75 = vector.extract %74[0, 0, 0] : f32 from vector<1x1x1xf32>
      %76 = vector.broadcast %75 : f32 to vector<1x1xf32>
      %cst_43 = arith.constant 0.001953125 : f32
      %77 = vector.broadcast %cst_43 : f32 to vector<1x1xf32>
      %78 = arith.mulf %77, %76 : vector<1x1xf32>
      %79 = arith.addf %71, %78 : vector<1x1xf32>
      %c0_44 = arith.constant 0 : index
      %c0_45 = arith.constant 0 : index
      %80 = vector.load %arg9[%c0_44, %c0_45] : memref<1x1xf32, #tpu.memory_space<vmem>>, vector<1x1xf32>
      tpu.vector_store %arg9[%c0_44, %c0_45], %79 {strides = array<i32>} : memref<1x1xf32, #tpu.memory_space<vmem>>, vector<1x1xf32>,
    } else {
    }
    %c1_i32_31 = arith.constant 1 : i32
    %59 = arith.cmpi eq, %arg0, %c1_i32_31 : i32
    %60 = arith.extui %59 : i1 to i32
    %c0_i32_32 = arith.constant 0 : i32
    %61 = arith.cmpi ne, %60, %c0_i32_32 : i32
    scf.if %61 {
      %67 = arith.index_cast %arg1 : i32 to index
      %c0_36 = arith.constant 0 : index
      %c0_37 = arith.constant 0 : index
      %68 = vector.load %arg12[%67, %c0_36, %c0_37] : memref<2x1x128xf32, #tpu.memory_space<vmem>>, vector<1x1x128xf32>
      %69 = vector.shape_cast %68 : vector<1x1x128xf32> to vector<1x128xf32>
      %70 = arith.index_cast %arg1 : i32 to index
      %c0_38 = arith.constant 0 : index
      %c0_39 = arith.constant 0 : index
      %71 = vector.load %arg13[%70, %c0_38, %c0_39] : memref<2x1x128xf32, #tpu.memory_space<vmem>>, vector<1x1x128xf32>
      %72 = vector.shape_cast %71 : vector<1x1x128xf32> to vector<1x128xf32>
      %73 = math.log %72 : vector<1x128xf32>
      %74 = arith.addf %69, %73 : vector<1x128xf32>
      %c0_40 = arith.constant 0 : index
      %c0_41 = arith.constant 0 : index
      %75 = vector.load %arg9[%c0_40, %c0_41] : memref<1x1xf32, #tpu.memory_space<vmem>>, vector<1x1xf32>
      %76 = vector.shape_cast %74 : vector<1x128xf32> to vector<1x1x128xf32>
      %cst_42 = arith.constant dense<0.000000e+00> : vector<1xf32>
      %77 = vector.multi_reduction <add>, %76, %cst_42 [1, 2] : vector<1x1x128xf32> to vector<1xf32>
      %78 = vector.shape_cast %77 : vector<1xf32> to vector<1x1x1xf32>
      %79 = vector.extract %78[0, 0, 0] : f32 from vector<1x1x1xf32>
      %80 = vector.broadcast %79 : f32 to vector<1x1xf32>
      %cst_43 = arith.constant 0.001953125 : f32
      %81 = vector.broadcast %cst_43 : f32 to vector<1x1xf32>
      %82 = arith.mulf %81, %80 : vector<1x1xf32>
      %83 = arith.addf %75, %82 : vector<1x1xf32>
      %c0_44 = arith.constant 0 : index
      %c0_45 = arith.constant 0 : index
      %84 = vector.load %arg9[%c0_44, %c0_45] : memref<1x1xf32, #tpu.memory_space<vmem>>, vector<1x1xf32>
      tpu.vector_store %arg9[%c0_44, %c0_45], %83 {strides = array<i32>} : memref<1x1xf32, #tpu.memory_space<vmem>>, vector<1x1xf32>,
    } else {
    }
    %c1_i32_33 = arith.constant 1 : i32
    %62 = arith.cmpi eq, %arg0, %c1_i32_33 : i32
    %c1_i32_34 = arith.constant 1 : i32
    %63 = arith.cmpi eq, %arg1, %c1_i32_34 : i32
    %64 = arith.andi %62, %63 : i1
    %65 = arith.extui %64 : i1 to i32
    %c0_i32_35 = arith.constant 0 : i32
    %66 = arith.cmpi ne, %65, %c0_i32_35 : i32
    scf.if %66 {
      %c0_36 = arith.constant 0 : index
      %c0_37 = arith.constant 0 : index
      %67 = vector.load %arg9[%c0_36, %c0_37] : memref<1x1xf32, #tpu.memory_space<vmem>>, vector<1x1xf32>
      %c0_38 = arith.constant 0 : index
      %c0_39 = arith.constant 0 : index
      %68 = vector.load %arg8[%c0_38, %c0_39] : memref<1x1xf32, #tpu.memory_space<vmem>>, vector<1x1xf32>
      tpu.vector_store %arg8[%c0_38, %c0_39], %67 {strides = array<i32>} : memref<1x1xf32, #tpu.memory_space<vmem>>, vector<1x1xf32>,
    } else {
    }
    return
  }
  func.func @transform_0(%arg0: i32, %arg1: i32) -> (i32, i32) {
    %c0_i32 = arith.constant 0 : i32
    %c0_i32_0 = arith.constant 0 : i32
    %c0_i32_1 = arith.constant 0 : i32
    return %c0_i32, %c0_i32_0 : i32, i32
  }
  func.func @transform_1(%arg0: i32, %arg1: i32) -> (i32, i32) {
    %c0_i32 = arith.constant 0 : i32
    %c0_i32_0 = arith.constant 0 : i32
    return %arg0, %c0_i32 : i32, i32
  }
  func.func @transform_2(%arg0: i32, %arg1: i32) -> (i32, i32) {
    %c0_i32 = arith.constant 0 : i32
    %c0_i32_0 = arith.constant 0 : i32
    return %arg1, %c0_i32 : i32, i32
  }
  func.func @transform_3(%arg0: i32, %arg1: i32) -> (i32, i32) {
    %c0_i32 = arith.constant 0 : i32
    %c0_i32_0 = arith.constant 0 : i32
    return %arg0, %c0_i32 : i32, i32
  }
  func.func @transform_4(%arg0: i32, %arg1: i32) -> (i32, i32) {
    %c0_i32 = arith.constant 0 : i32
    %c0_i32_0 = arith.constant 0 : i32
    return %arg0, %c0_i32 : i32, i32
  }
  func.func @transform_5(%arg0: i32, %arg1: i32) -> (i32, i32) {
    %c0_i32 = arith.constant 0 : i32
    %c0_i32_0 = arith.constant 0 : i32
    return %arg0, %c0_i32 : i32, i32
  }
  func.func @transform_6(%arg0: i32, %arg1: i32) -> (i32, i32) {
    %c0_i32 = arith.constant 0 : i32
    %c0_i32_0 = arith.constant 0 : i32
    %c0_i32_1 = arith.constant 0 : i32
    return %c0_i32, %c0_i32_0 : i32, i32
  }
}

</mosaic_0001>

<llo_original>
// kernel: tpu_custom_call.1
$region0: #{tpu_custom_call.1}
  #allocation0 [shape = 'u32[]', space=smem, size = 0x4, offset = 0x4, fixed_abs, tag = 'smem constant byte address 0x4 - core index']
  #allocation1 [shape = 'u32[144,128]{1,0:T(1,128)}', space=vmem, size = 0x12000, scoped, tag = 'internal scratch']
  #allocation2 [shape = 'f32[1,1]{1,0:T(1,128)}', space=vmem, size = 0x200, scoped, tag = 'scratch operand']
  #allocation3 [shape = 'f32[128,1]{1,0:T(8,128)}', space=vmem, size = 0x10000, scoped, tag = 'scratch operand']
  #allocation4 [shape = 'f32[128,1]{1,0:T(8,128)}', space=vmem, size = 0x10000, scoped, tag = 'scratch operand']
  #allocation5 [shape = 'f32[2,1,128]{2,1,0:T(1,128)}', space=vmem, size = 0x400, scoped, tag = 'scratch operand']
  #allocation6 [shape = 'f32[2,1,128]{2,1,0:T(1,128)}', space=vmem, size = 0x400, scoped, tag = 'scratch operand']
  #allocation7 [shape = 'f32[1,1]{1,0:T(1,128)S(6)}', space=smem, size = 0x200, scoped, tag = 'scoped memory for tpu_custom_call.1']
  %s0 = inlined_call_operand.<no memory space> [shape: f32[1,1], index: 0, kind: input, shape index: {}]
  %s1 = inlined_call_operand.vmem [shape: f32[256,64], index: 1, kind: input, shape index: {}]
  %s2 = inlined_call_operand.vmem [shape: f32[256,64], index: 2, kind: input, shape index: {}]
  %s3 = inlined_call_operand.vmem [shape: f32[256,64], index: 3, kind: input, shape index: {}]
  %s4 = inlined_call_operand.vmem [shape: f32[256,64], index: 4, kind: input, shape index: {}]
  %s5 = inlined_call_operand.vmem [shape: f32[256,64], index: 5, kind: input, shape index: {}]
  %s6 = inlined_call_operand.hbm [shape: f32[1,1], index: 6, kind: output, shape index: {}]
  %s7 = sld [smem:[#allocation0]]
  $region77: #{tpu_custom_call.1} parent=0
    _
  %s9 = ssub.s32 1, %s7
  %s10 = scalar_select 0, %s9, %s7
  %11 = sst [smem:[#allocation7]] %s0
  $region1: #{tpu_custom_call.1} parent=0
    #allocation8 [shape = 'u8[512]{0}', space=vmem, size = 0x400, scoped, tag = 'output window, operand 0, single buffered']
    #allocation9 [shape = 's32[2]{0}', space=sflag, size = 0x8, scoped, tag = 'scoped memory for tpu_custom_call.1']
    %12 = vsyncpa [#allocation9], 0
    loop: start=0, step=1, limit=6
    $region2: #{tpu_custom_call.1} parent=1 // loop_pre_header
      _
    $region3: #{tpu_custom_call.1} parent=1 // loop_header
      %s14 = sphi 0, %s18
      %p15 = scmp.ge.s32.totalorder %s14, 6
      %s21 = sphi 0, %s33
      %s22 = sphi 0, %s29
      %s23 = sphi 0, %s21
      %s24 = sphi 0, %s22
      %s25 = sphi 0, %s23
      %s26 = sphi 0, %s24
      %s34 = sphi 0, %s34
      %s36 = sphi 0, %s34
      %s37 = sphi 0, %s36
      %s51 = sphi 0, %s37
      %s57 = sphi 0, %s59
      %s60 = sphi 0, %s57
      %s61 = sphi 0, %s60
      %s77 = sphi 0, %s61
      %s83 = sphi 0, %s85
      %s86 = sphi 0, %s83
      %s87 = sphi 0, %s86
      %s103 = sphi 0, %s87
      %s109 = sphi 0, %s111
      %s112 = sphi 0, %s109
      %s113 = sphi 0, %s112
      %s129 = sphi 0, %s113
      %s135 = sphi 0, %s137
      %s138 = sphi 0, %s135
      %s139 = sphi 0, %s138
      %s155 = sphi 0, %s139
      %s161 = sphi 0, %s163
      %s164 = sphi 0, %s161
      %s165 = sphi 0, %s164
      %s181 = sphi 0, %s165
      %s185 = sphi 0, %s185
      %s187 = sphi 0, %s185
      %s188 = sphi 0, %s187
      %s202 = sphi 0, %s188
    $region4: #{tpu_custom_call.1} parent=1 // loop_header_branch
      %17 = sbr.rel (%p15) target = $region8
    $region5: #{tpu_custom_call.1} parent=1 // loop_body
      %s19 = ssub.s32 %s14, 1
      %s20 = ssub.s32 %s14, 2
      %s27 = sadd.s32 1, %s22
      %p28 = scmp.ge.s32.totalorder %s27, 2
      %s29 = scalar_select %p28, 0, %s27
      %s30 = sadd.s32 1, %s21
      %s31 = scalar_select %p28, %s30, %s21
      %p32 = scmp.ge.s32.totalorder %s31, 2
      %s33 = scalar_select %p32, 0, %s31
      %s35 = sadd.s32 %s34, 1
      %p38 = scmp.eq.s32.totalorder %s14, 3
      %p39 = scmp.ne.s32.totalorder %s34, %s36
      %p40 = scmp.eq.s32.totalorder %s14, 0
      %p41 = por %p39, %p40
      %p42 = scmp.ne.s32.totalorder %s34, %s36
      %p43 = scmp.eq.s32.totalorder %s19, 3
      %p44 = por %p42, %p43
      %p45 = scmp.ne.s32.totalorder %s36, %s37
      %p46 = scmp.eq.s32.totalorder %s19, 0
      %p47 = por %p45, %p46
      %p48 = scmp.ne.s32.totalorder %s36, %s37
      %p49 = scmp.eq.s32.totalorder %s20, 3
      %p50 = por %p48, %p49
      %p52 = scmp.ne.s32.totalorder %s37, %s51
      %p53 = scmp.eq.s32.totalorder %s20, 0
      %p54 = por %p52, %p53
      %s55 = ssub.s32 %s21, %s33
      %p56 = scmp.eq.s32.totalorder %s55, 0
      %s58 = sadd.s32 %s57, 1
      %s59 = scalar_select %p56, %s57, %s58
      %p62 = pneg %p56
      %p63 = scmp.eq.s32.totalorder %s14, 3
      %p64 = por %p62, %p63
      %p65 = scmp.ne.s32.totalorder %s57, %s60
      %p66 = scmp.eq.s32.totalorder %s14, 0
      %p67 = por %p65, %p66
      %p68 = scmp.ne.s32.totalorder %s57, %s60
      %p69 = scmp.eq.s32.totalorder %s19, 3
      %p70 = por %p68, %p69
      %p71 = scmp.ne.s32.totalorder %s60, %s61
      %p72 = scmp.eq.s32.totalorder %s19, 0
      %p73 = por %p71, %p72
      %p74 = scmp.ne.s32.totalorder %s60, %s61
      %p75 = scmp.eq.s32.totalorder %s20, 3
      %p76 = por %p74, %p75
      %p78 = scmp.ne.s32.totalorder %s61, %s77
      %p79 = scmp.eq.s32.totalorder %s20, 0
      %p80 = por %p78, %p79
      %s81 = ssub.s32 %s22, %s29
      %p82 = scmp.eq.s32.totalorder %s81, 0
      %s84 = sadd.s32 %s83, 1
      %s85 = scalar_select %p82, %s83, %s84
      %p88 = pneg %p82
      %p89 = scmp.eq.s32.totalorder %s14, 3
      %p90 = por %p88, %p89
      %p91 = scmp.ne.s32.totalorder %s83, %s86
      %p92 = scmp.eq.s32.totalorder %s14, 0
      %p93 = por %p91, %p92
      %p94 = scmp.ne.s32.totalorder %s83, %s86
      %p95 = scmp.eq.s32.totalorder %s19, 3
      %p96 = por %p94, %p95
      %p97 = scmp.ne.s32.totalorder %s86, %s87
      %p98 = scmp.eq.s32.totalorder %s19, 0
      %p99 = por %p97, %p98
      %p100 = scmp.ne.s32.totalorder %s86, %s87
      %p101 = scmp.eq.s32.totalorder %s20, 3
      %p102 = por %p100, %p101
      %p104 = scmp.ne.s32.totalorder %s87, %s103
      %p105 = scmp.eq.s32.totalorder %s20, 0
      %p106 = por %p104, %p105
      %s107 = ssub.s32 %s21, %s33
      %p108 = scmp.eq.s32.totalorder %s107, 0
      %s110 = sadd.s32 %s109, 1
      %s111 = scalar_select %p108, %s109, %s110
      %p114 = pneg %p108
      %p115 = scmp.eq.s32.totalorder %s14, 3
      %p116 = por %p114, %p115
      %p117 = scmp.ne.s32.totalorder %s109, %s112
      %p118 = scmp.eq.s32.totalorder %s14, 0
      %p119 = por %p117, %p118
      %p120 = scmp.ne.s32.totalorder %s109, %s112
      %p121 = scmp.eq.s32.totalorder %s19, 3
      %p122 = por %p120, %p121
      %p123 = scmp.ne.s32.totalorder %s112, %s113
      %p124 = scmp.eq.s32.totalorder %s19, 0
      %p125 = por %p123, %p124
      %p126 = scmp.ne.s32.totalorder %s112, %s113
      %p127 = scmp.eq.s32.totalorder %s20, 3
      %p128 = por %p126, %p127
      %p130 = scmp.ne.s32.totalorder %s113, %s129
      %p131 = scmp.eq.s32.totalorder %s20, 0
      %p132 = por %p130, %p131
      %s133 = ssub.s32 %s21, %s33
      %p134 = scmp.eq.s32.totalorder %s133, 0
      %s136 = sadd.s32 %s135, 1
      %s137 = scalar_select %p134, %s135, %s136
      %p140 = pneg %p134
      %p141 = scmp.eq.s32.totalorder %s14, 3
      %p142 = por %p140, %p141
      %p143 = scmp.ne.s32.totalorder %s135, %s138
      %p144 = scmp.eq.s32.totalorder %s14, 0
      %p145 = por %p143, %p144
      %p146 = scmp.ne.s32.totalorder %s135, %s138
      %p147 = scmp.eq.s32.totalorder %s19, 3
      %p148 = por %p146, %p147
      %p149 = scmp.ne.s32.totalorder %s138, %s139
      %p150 = scmp.eq.s32.totalorder %s19, 0
      %p151 = por %p149, %p150
      %p152 = scmp.ne.s32.totalorder %s138, %s139
      %p153 = scmp.eq.s32.totalorder %s20, 3
      %p154 = por %p152, %p153
      %p156 = scmp.ne.s32.totalorder %s139, %s155
      %p157 = scmp.eq.s32.totalorder %s20, 0
      %p158 = por %p156, %p157
      %s159 = ssub.s32 %s21, %s33
      %p160 = scmp.eq.s32.totalorder %s159, 0
      %s162 = sadd.s32 %s161, 1
      %s163 = scalar_select %p160, %s161, %s162
      %p166 = pneg %p160
      %p167 = scmp.eq.s32.totalorder %s14, 3
      %p168 = por %p166, %p167
      %p169 = scmp.ne.s32.totalorder %s161, %s164
      %p170 = scmp.eq.s32.totalorder %s14, 0
      %p171 = por %p169, %p170
      %p172 = scmp.ne.s32.totalorder %s161, %s164
      %p173 = scmp.eq.s32.totalorder %s19, 3
      %p174 = por %p172, %p173
      %p175 = scmp.ne.s32.totalorder %s164, %s165
      %p176 = scmp.eq.s32.totalorder %s19, 0
      %p177 = por %p175, %p176
      %p178 = scmp.ne.s32.totalorder %s164, %s165
      %p179 = scmp.eq.s32.totalorder %s20, 3
      %p180 = por %p178, %p179
      %p182 = scmp.ne.s32.totalorder %s165, %s181
      %p183 = scmp.eq.s32.totalorder %s20, 0
      %p184 = por %p182, %p183
      %s186 = sadd.s32 %s185, 1
      %p189 = scmp.eq.s32.totalorder %s14, 3
      %p190 = scmp.ne.s32.totalorder %s185, %s187
      %p191 = scmp.eq.s32.totalorder %s14, 0
      %p192 = por %p190, %p191
      %p193 = scmp.ne.s32.totalorder %s185, %s187
      %p194 = scmp.eq.s32.totalorder %s19, 3
      %p195 = por %p193, %p194
      %p196 = scmp.ne.s32.totalorder %s187, %s188
      %p197 = scmp.eq.s32.totalorder %s19, 0
      %p198 = por %p196, %p197
      %p199 = scmp.ne.s32.totalorder %s187, %s188
      %p200 = scmp.eq.s32.totalorder %s20, 3
      %p201 = por %p199, %p200
      %p203 = scmp.ne.s32.totalorder %s188, %s202
      %p204 = scmp.eq.s32.totalorder %s20, 0
      %p205 = por %p203, %p204
      %p206 = scmp.le.s32.totalorder 1, %s14
      %p207 = scmp.lt.s32.totalorder %s14, 5
      %p208 = pnand %p206, %p207
      %p209 = pneg %p208
      // Predicated region
      $region9: #{tpu_custom_call.1} parent=5 // pred_check
        _
      $region10: #{tpu_custom_call.1} parent=5 // pred_check_branch
        %211 = sbr.rel (%p208) target = $region12
      $region11: #{tpu_custom_call.1} parent=5 // pred_region
        %s212 = ssub.s32 %s14, 1
        // Predicated region
        $region13: #{tpu_custom_call.1} parent=11 // pred_check
          %p213 = pneg %p47
        $region14: #{tpu_custom_call.1} parent=11 // pred_check_branch
          %215 = sbr.rel (%p213) target = $region16
        $region15: #{tpu_custom_call.1} parent=11 // pred_region
          _
        $region16: #{tpu_custom_call.1} parent=11 // pred_fallthru
          _
      $region12: #{tpu_custom_call.1} parent=5 // pred_fallthru
        _
      %p216 = scmp.lt.s32.totalorder %s14, 4
      // Predicated region
      $region17: #{tpu_custom_call.1} parent=5 // pred_check
        %p217 = pneg %p216
      $region18: #{tpu_custom_call.1} parent=5 // pred_check_branch
        %219 = sbr.rel (%p217) target = $region20
      $region19: #{tpu_custom_call.1} parent=5 // pred_region
        // Predicated region
        $region21: #{tpu_custom_call.1} parent=19 // pred_check
          %p220 = pneg %p67
        $region22: #{tpu_custom_call.1} parent=19 // pred_check_branch
          %222 = sbr.rel (%p220) target = $region24
        $region23: #{tpu_custom_call.1} parent=19 // pred_region
          %s223 = smul.u32 16, %s21
          %p224 = scmp.lt.s32.totalorder %s223, 31
          %s225 = scalar_select %p224, %s223, 31
          %s226 = smul.addr %s225, 8
          %s227 = scalar_lea.vmem %s1, %s226
          %s228 = smul.u32 16, %s21
        $region24: #{tpu_custom_call.1} parent=19 // pred_fallthru
          _
        // Predicated region
        $region25: #{tpu_custom_call.1} parent=19 // pred_check
          %p229 = pneg %p93
        $region26: #{tpu_custom_call.1} parent=19 // pred_check_branch
          %231 = sbr.rel (%p229) target = $region28
        $region27: #{tpu_custom_call.1} parent=19 // pred_region
          %s232 = smul.u32 16, %s22
          %p233 = scmp.lt.s32.totalorder %s232, 31
          %s234 = scalar_select %p233, %s232, 31
          %s235 = smul.addr %s234, 8
          %s236 = scalar_lea.vmem %s2, %s235
          %s237 = smul.u32 16, %s22
        $region28: #{tpu_custom_call.1} parent=19 // pred_fallthru
          _
        // Predicated region
        $region29: #{tpu_custom_call.1} parent=19 // pred_check
          %p238 = pneg %p119
        $region30: #{tpu_custom_call.1} parent=19 // pred_check_branch
          %240 = sbr.rel (%p238) target = $region32
        $region31: #{tpu_custom_call.1} parent=19 // pred_region
          %s241 = smul.u32 16, %s21
          %p242 = scmp.lt.s32.totalorder %s241, 31
          %s243 = scalar_select %p242, %s241, 31
          %s244 = smul.addr %s243, 8
          %s245 = scalar_lea.vmem %s3, %s244
          %s246 = smul.u32 16, %s21
        $region32: #{tpu_custom_call.1} parent=19 // pred_fallthru
          _
        // Predicated region
        $region33: #{tpu_custom_call.1} parent=19 // pred_check
          %p247 = pneg %p145
        $region34: #{tpu_custom_call.1} parent=19 // pred_check_branch
          %249 = sbr.rel (%p247) target = $region36
        $region35: #{tpu_custom_call.1} parent=19 // pred_region
          %s250 = smul.u32 16, %s21
          %p251 = scmp.lt.s32.totalorder %s250, 31
          %s252 = scalar_select %p251, %s250, 31
          %s253 = smul.addr %s252, 8
          %s254 = scalar_lea.vmem %s4, %s253
          %s255 = smul.u32 16, %s21
        $region36: #{tpu_custom_call.1} parent=19 // pred_fallthru
          _
        // Predicated region
        $region37: #{tpu_custom_call.1} parent=19 // pred_check
          %p256 = pneg %p171
        $region38: #{tpu_custom_call.1} parent=19 // pred_check_branch
          %258 = sbr.rel (%p256) target = $region40
        $region39: #{tpu_custom_call.1} parent=19 // pred_region
          %s259 = smul.u32 16, %s21
          %p260 = scmp.lt.s32.totalorder %s259, 31
          %s261 = scalar_select %p260, %s259, 31
          %s262 = smul.addr %s261, 8
          %s263 = scalar_lea.vmem %s5, %s262
          %s264 = smul.u32 16, %s21
        $region40: #{tpu_custom_call.1} parent=19 // pred_fallthru
          _
      $region20: #{tpu_custom_call.1} parent=5 // pred_fallthru
        _
      %p265 = scmp.le.s32.totalorder 1, %s14
      %p266 = scmp.lt.s32.totalorder %s14, 5
      %p267 = pnand %p265, %p266
      %p268 = pneg %p267
      // Predicated region
      $region41: #{tpu_custom_call.1} parent=5 // pred_check
        _
      $region42: #{tpu_custom_call.1} parent=5 // pred_check_branch
        %270 = sbr.rel (%p267) target = $region44
      $region43: #{tpu_custom_call.1} parent=5 // pred_region
        %s271 = ssub.s32 %s14, 1
        %p272 = pneg %p47
        %p273 = pneg %p44
        %s274 = smul.u32 16, %s23
        %p275 = scmp.lt.s32.totalorder %s274, 31
        %s276 = scalar_select %p275, %s274, 31
        %s277 = smul.addr %s276, 8
        %s278 = scalar_lea.vmem %s1, %s277
        %p279 = pneg %p73
        %p280 = pneg %p70
        %s281 = smul.u32 16, %s24
        %p282 = scmp.lt.s32.totalorder %s281, 31
        %s283 = scalar_select %p282, %s281, 31
        %s284 = smul.addr %s283, 8
        %s285 = scalar_lea.vmem %s2, %s284
        %p286 = pneg %p99
        %p287 = pneg %p96
        %s288 = smul.u32 16, %s23
        %p289 = scmp.lt.s32.totalorder %s288, 31
        %s290 = scalar_select %p289, %s288, 31
        %s291 = smul.addr %s290, 8
        %s292 = scalar_lea.vmem %s3, %s291
        %p293 = pneg %p125
        %p294 = pneg %p122
        %s295 = smul.u32 16, %s23
        %p296 = scmp.lt.s32.totalorder %s295, 31
        %s297 = scalar_select %p296, %s295, 31
        %s298 = smul.addr %s297, 8
        %s299 = scalar_lea.vmem %s4, %s298
        %p300 = pneg %p151
        %p301 = pneg %p148
        %s302 = smul.u32 16, %s23
        %p303 = scmp.lt.s32.totalorder %s302, 31
        %s304 = scalar_select %p303, %s302, 31
        %s305 = smul.addr %s304, 8
        %s306 = scalar_lea.vmem %s5, %s305
        %p307 = pneg %p177
        %p308 = pneg %p174
        %p309 = pneg %p198
        %p310 = pneg %p195
        %s311 = smul.u32 16, %s23
        %p312 = scmp.lt.s32.totalorder %s311, 31
        %s313 = scalar_select %p312, %s311, 31
        %s314 = smul.addr %s313, 8
        %s315 = scalar_lea.vmem %s1, %s314
        %s316 = smul.u32 16, %s23
        %s317 = smul.u32 16, %s24
        %p318 = scmp.lt.s32.totalorder %s317, 31
        %s319 = scalar_select %p318, %s317, 31
        %s320 = smul.addr %s319, 8
        %s321 = scalar_lea.vmem %s2, %s320
        %s322 = smul.u32 16, %s24
        %s323 = smul.u32 16, %s23
        %p324 = scmp.lt.s32.totalorder %s323, 31
        %s325 = scalar_select %p324, %s323, 31
        %s326 = smul.addr %s325, 8
        %s327 = scalar_lea.vmem %s3, %s326
        %s328 = smul.u32 16, %s23
        %s329 = smul.u32 16, %s23
        %p330 = scmp.lt.s32.totalorder %s329, 31
        %s331 = scalar_select %p330, %s329, 31
        %s332 = smul.addr %s331, 8
        %s333 = scalar_lea.vmem %s4, %s332
        %s334 = smul.u32 16, %s23
        %s335 = smul.u32 16, %s23
        %p336 = scmp.lt.s32.totalorder %s335, 31
        %s337 = scalar_select %p336, %s335, 31
        %s338 = smul.addr %s337, 8
        %s339 = scalar_lea.vmem %s5, %s338
        %s340 = smul.u32 16, %s23
        %s341 = sld [smem:[#allocation7]]
        %p342 = scmp.eq.s32.totalorder %s23, 0
        %p343 = scmp.eq.s32.totalorder %s24, 0
        %p344 = pnand %p342, %p343
        %p345 = pneg %p344
        // Predicated region
        $region45: #{tpu_custom_call.1} parent=43 // pred_check
          _
        $region46: #{tpu_custom_call.1} parent=43 // pred_check_branch
          %347 = sbr.rel (%p344) target = $region48
        $region47: #{tpu_custom_call.1} parent=43 // pred_region
          %vm348 = vcmask 0
          %349 = vst.msk [vmem:[#allocation2] sm:$0x1] %vm348, 0.0
          %350 = vst [vmem:[#allocation5] sm:$0x1] -inf
          %351 = vst [vmem:[#allocation5 + $0x1] sm:$0x1] -inf
          %352 = vst [vmem:[#allocation6] sm:$0x1] 0.0
          %353 = vst [vmem:[#allocation6 + $0x1] sm:$0x1] 0.0
        $region48: #{tpu_custom_call.1} parent=43 // pred_fallthru
          _
        // Predicated region
        $region49: #{tpu_custom_call.1} parent=43 // pred_check
          %p354 = pneg %p343
        $region50: #{tpu_custom_call.1} parent=43 // pred_check_branch
          %356 = sbr.rel (%p354) target = $region52
        $region51: #{tpu_custom_call.1} parent=43 // pred_region
          %vm357 = vcmask 7168
          %358 = vst.msk [vmem:[#allocation3] sm:$0xff] %vm357, -inf
          %359 = vst.msk [vmem:[#allocation3 + $0x8] sm:$0xff] %vm357, -inf
          %360 = vst.msk [vmem:[#allocation3 + $0x10] sm:$0xff] %vm357, -inf
          %361 = vst.msk [vmem:[#allocation3 + $0x18] sm:$0xff] %vm357, -inf
          %362 = vst.msk [vmem:[#allocation3 + $0x20] sm:$0xff] %vm357, -inf
          %363 = vst.msk [vmem:[#allocation3 + $0x28] sm:$0xff] %vm357, -inf
          %364 = vst.msk [vmem:[#allocation3 + $0x30] sm:$0xff] %vm357, -inf
          %365 = vst.msk [vmem:[#allocation3 + $0x38] sm:$0xff] %vm357, -inf
          %366 = vst.msk [vmem:[#allocation3 + $0x40] sm:$0xff] %vm357, -inf
          %367 = vst.msk [vmem:[#allocation3 + $0x48] sm:$0xff] %vm357, -inf
          %368 = vst.msk [vmem:[#allocation3 + $0x50] sm:$0xff] %vm357, -inf
          %369 = vst.msk [vmem:[#allocation3 + $0x58] sm:$0xff] %vm357, -inf
          %370 = vst.msk [vmem:[#allocation3 + $0x60] sm:$0xff] %vm357, -inf
          %371 = vst.msk [vmem:[#allocation3 + $0x68] sm:$0xff] %vm357, -inf
          %372 = vst.msk [vmem:[#allocation3 + $0x70] sm:$0xff] %vm357, -inf
          %373 = vst.msk [vmem:[#allocation3 + $0x78] sm:$0xff] %vm357, -inf
          %374 = vst.msk [vmem:[#allocation4] sm:$0xff] %vm357, 0.0
          %375 = vst.msk [vmem:[#allocation4 + $0x8] sm:$0xff] %vm357, 0.0
          %376 = vst.msk [vmem:[#allocation4 + $0x10] sm:$0xff] %vm357, 0.0
          %377 = vst.msk [vmem:[#allocation4 + $0x18] sm:$0xff] %vm357, 0.0
          %378 = vst.msk [vmem:[#allocation4 + $0x20] sm:$0xff] %vm357, 0.0
          %379 = vst.msk [vmem:[#allocation4 + $0x28] sm:$0xff] %vm357, 0.0
          %380 = vst.msk [vmem:[#allocation4 + $0x30] sm:$0xff] %vm357, 0.0
          %381 = vst.msk [vmem:[#allocation4 + $0x38] sm:$0xff] %vm357, 0.0
          %382 = vst.msk [vmem:[#allocation4 + $0x40] sm:$0xff] %vm357, 0.0
          %383 = vst.msk [vmem:[#allocation4 + $0x48] sm:$0xff] %vm357, 0.0
          %384 = vst.msk [vmem:[#allocation4 + $0x50] sm:$0xff] %vm357, 0.0
          %385 = vst.msk [vmem:[#allocation4 + $0x58] sm:$0xff] %vm357, 0.0
          %386 = vst.msk [vmem:[#allocation4 + $0x60] sm:$0xff] %vm357, 0.0
          %387 = vst.msk [vmem:[#allocation4 + $0x68] sm:$0xff] %vm357, 0.0
          %388 = vst.msk [vmem:[#allocation4 + $0x70] sm:$0xff] %vm357, 0.0
          %389 = vst.msk [vmem:[#allocation4 + $0x78] sm:$0xff] %vm357, 0.0
          %v390 = vld [vmem:[%s315] sm:$0xff]
          %v391 = vld [vmem:[%s315 + $0x8] sm:$0xff]
          %v392 = vld [vmem:[%s315 + $0x10] sm:$0xff]
          %v393 = vld [vmem:[%s315 + $0x18] sm:$0xff]
          %v394 = vld [vmem:[%s315 + $0x20] sm:$0xff]
          %v395 = vld [vmem:[%s315 + $0x28] sm:$0xff]
          %v396 = vld [vmem:[%s315 + $0x30] sm:$0xff]
          %v397 = vld [vmem:[%s315 + $0x38] sm:$0xff]
          %v398 = vld [vmem:[%s315 + $0x40] sm:$0xff]
          %v399 = vld [vmem:[%s315 + $0x48] sm:$0xff]
          %v400 = vld [vmem:[%s315 + $0x50] sm:$0xff]
          %v401 = vld [vmem:[%s315 + $0x58] sm:$0xff]
          %v402 = vld [vmem:[%s315 + $0x60] sm:$0xff]
          %v403 = vld [vmem:[%s315 + $0x68] sm:$0xff]
          %v404 = vld [vmem:[%s315 + $0x70] sm:$0xff]
          %v405 = vld [vmem:[%s315 + $0x78] sm:$0xff]
          %v406 = vld [vmem:[%s333] sm:$0xff]
          %v407 = vld [vmem:[%s333 + $0x8] sm:$0xff]
          %v408 = vld [vmem:[%s333 + $0x10] sm:$0xff]
          %v409 = vld [vmem:[%s333 + $0x18] sm:$0xff]
          %v410 = vld [vmem:[%s333 + $0x20] sm:$0xff]
          %v411 = vld [vmem:[%s333 + $0x28] sm:$0xff]
          %v412 = vld [vmem:[%s333 + $0x30] sm:$0xff]
          %v413 = vld [vmem:[%s333 + $0x38] sm:$0xff]
          %v414 = vld [vmem:[%s333 + $0x40] sm:$0xff]
          %v415 = vld [vmem:[%s333 + $0x48] sm:$0xff]
          %v416 = vld [vmem:[%s333 + $0x50] sm:$0xff]
          %v417 = vld [vmem:[%s333 + $0x58] sm:$0xff]
          %v418 = vld [vmem:[%s333 + $0x60] sm:$0xff]
          %v419 = vld [vmem:[%s333 + $0x68] sm:$0xff]
          %v420 = vld [vmem:[%s333 + $0x70] sm:$0xff]
          %v421 = vld [vmem:[%s333 + $0x78] sm:$0xff]
          %v422 = vld [vmem:[%s327] sm:$0xff]
          %v423 = vld [vmem:[%s327 + $0x8] sm:$0xff]
          %v424 = vld [vmem:[%s327 + $0x10] sm:$0xff]
          %v425 = vld [vmem:[%s327 + $0x18] sm:$0xff]
          %v426 = vld [vmem:[%s327 + $0x20] sm:$0xff]
          %v427 = vld [vmem:[%s327 + $0x28] sm:$0xff]
          %v428 = vld [vmem:[%s327 + $0x30] sm:$0xff]
          %v429 = vld [vmem:[%s327 + $0x38] sm:$0xff]
          %v430 = vld [vmem:[%s327 + $0x40] sm:$0xff]
          %v431 = vld [vmem:[%s327 + $0x48] sm:$0xff]
          %v432 = vld [vmem:[%s327 + $0x50] sm:$0xff]
          %v433 = vld [vmem:[%s327 + $0x58] sm:$0xff]
          %v434 = vld [vmem:[%s327 + $0x60] sm:$0xff]
          %v435 = vld [vmem:[%s327 + $0x68] sm:$0xff]
          %v436 = vld [vmem:[%s327 + $0x70] sm:$0xff]
          %v437 = vld [vmem:[%s327 + $0x78] sm:$0xff]
          %v438 = vld [vmem:[%s339] sm:$0xff]
          %v439 = vld [vmem:[%s339 + $0x8] sm:$0xff]
          %v440 = vld [vmem:[%s339 + $0x10] sm:$0xff]
          %v441 = vld [vmem:[%s339 + $0x18] sm:$0xff]
          %v442 = vld [vmem:[%s339 + $0x20] sm:$0xff]
          %v443 = vld [vmem:[%s339 + $0x28] sm:$0xff]
          %v444 = vld [vmem:[%s339 + $0x30] sm:$0xff]
          %v445 = vld [vmem:[%s339 + $0x38] sm:$0xff]
          %v446 = vld [vmem:[%s339 + $0x40] sm:$0xff]
          %v447 = vld [vmem:[%s339 + $0x48] sm:$0xff]
          %v448 = vld [vmem:[%s339 + $0x50] sm:$0xff]
          %v449 = vld [vmem:[%s339 + $0x58] sm:$0xff]
          %v450 = vld [vmem:[%s339 + $0x60] sm:$0xff]
          %v451 = vld [vmem:[%s339 + $0x68] sm:$0xff]
          %v452 = vld [vmem:[%s339 + $0x70] sm:$0xff]
          %v453 = vld [vmem:[%s339 + $0x78] sm:$0xff]
          %v454 = vmul.f32 %v390, %v406
          %v455 = vmul.f32 %v391, %v407
          %v456 = vmul.f32 %v392, %v408
          %v457 = vmul.f32 %v393, %v409
          %v458 = vmul.f32 %v394, %v410
          %v459 = vmul.f32 %v395, %v411
          %v460 = vmul.f32 %v396, %v412
          %v461 = vmul.f32 %v397, %v413
          %v462 = vmul.f32 %v398, %v414
          %v463 = vmul.f32 %v399, %v415
          %v464 = vmul.f32 %v400, %v416
          %v465 = vmul.f32 %v401, %v417
          %v466 = vmul.f32 %v402, %v418
          %v467 = vmul.f32 %v403, %v419
          %v468 = vmul.f32 %v404, %v420
          %v469 = vmul.f32 %v405, %v421
          %v470 = vmul.f32 %v422, %v438
          %v471 = vmul.f32 %v423, %v439
          %v472 = vmul.f32 %v424, %v440
          %v473 = vmul.f32 %v425, %v441
          %v474 = vmul.f32 %v426, %v442
          %v475 = vmul.f32 %v427, %v443
          %v476 = vmul.f32 %v428, %v444
          %v477 = vmul.f32 %v429, %v445
          %v478 = vmul.f32 %v430, %v446
          %v479 = vmul.f32 %v431, %v447
          %v480 = vmul.f32 %v432, %v448
          %v481 = vmul.f32 %v433, %v449
          %v482 = vmul.f32 %v434, %v450
          %v483 = vmul.f32 %v435, %v451
          %v484 = vmul.f32 %v436, %v452
          %v485 = vmul.f32 %v437, %v453
          %v486 = vadd.f32 %v454, %v470
          %v487 = vadd.f32 %v455, %v471
          %v488 = vadd.f32 %v456, %v472
          %v489 = vadd.f32 %v457, %v473
          %v490 = vadd.f32 %v458, %v474
          %v491 = vadd.f32 %v459, %v475
          %v492 = vadd.f32 %v460, %v476
          %v493 = vadd.f32 %v461, %v477
          %v494 = vadd.f32 %v462, %v478
          %v495 = vadd.f32 %v463, %v479
          %v496 = vadd.f32 %v464, %v480
          %v497 = vadd.f32 %v465, %v481
          %v498 = vadd.f32 %v466, %v482
          %v499 = vadd.f32 %v467, %v483
          %v500 = vadd.f32 %v468, %v484
          %v501 = vadd.f32 %v469, %v485
          %vm502 = vcmask 523264
          %v503 = vsel %vm502, %v486, 0.0
          %v504 = vsel %vm502, %v487, 0.0
          %v505 = vadd.f32 %v503, %v504
          %v506 = vsel %vm502, %v488, 0.0
          %v507 = vadd.f32 %v505, %v506
          %v508 = vsel %vm502, %v489, 0.0
          %v509 = vadd.f32 %v507, %v508
          %v510 = vsel %vm502, %v490, 0.0
          %v511 = vadd.f32 %v509, %v510
          %v512 = vsel %vm502, %v491, 0.0
          %v513 = vadd.f32 %v511, %v512
          %v514 = vsel %vm502, %v492, 0.0
          %v515 = vadd.f32 %v513, %v514
          %v516 = vsel %vm502, %v493, 0.0
          %v517 = vadd.f32 %v515, %v516
          %v518 = vsel %vm502, %v494, 0.0
          %v519 = vadd.f32 %v517, %v518
          %v520 = vsel %vm502, %v495, 0.0
          %v521 = vadd.f32 %v519, %v520
          %v522 = vsel %vm502, %v496, 0.0
          %v523 = vadd.f32 %v521, %v522
          %v524 = vsel %vm502, %v497, 0.0
          %v525 = vadd.f32 %v523, %v524
          %v526 = vsel %vm502, %v498, 0.0
          %v527 = vadd.f32 %v525, %v526
          %v528 = vsel %vm502, %v499, 0.0
          %v529 = vadd.f32 %v527, %v528
          %v530 = vsel %vm502, %v500, 0.0
          %v531 = vadd.f32 %v529, %v530
          %v532 = vsel %vm502, %v501, 0.0
          %v533 = vadd.f32 %v531, %v532
          %534 = vadd.xlane.f32.xlu0 %v533
          %v535 = vpop.xlane.xlu0 %534
          %v536 = vrot.slane %v535, 4
          %v537 = vadd.f32 %v535, %v536
          %v538 = vrot.slane %v537, 2
          %v539 = vadd.f32 %v537, %v538
          %v540 = vrot.slane %v539, 1
          %v541 = vadd.f32 %v539, %v540
          %s542 = vtos %v541
          %v543 = vstv %s542
          %v544 = vld [vmem:[#allocation2] sm:$0x1]
          %s545 = smul.f32 %s341, -0.001953125
          %v546 = vstv %s545
          %v547 = vmul.f32 %v546, %v543
          %v548 = vadd.f32 %v544, %v547
          %vm549 = vcmask 0
          %550 = vst.msk [vmem:[#allocation2] sm:$0x1] %vm549, %v548
        $region52: #{tpu_custom_call.1} parent=43 // pred_fallthru
          _
        %v551 = vld [vmem:[%s315] sm:$0xff]
        %v552 = vld [vmem:[%s315 + $0x8] sm:$0xff]
        %v553 = vld [vmem:[%s315 + $0x10] sm:$0xff]
        %v554 = vld [vmem:[%s315 + $0x18] sm:$0xff]
        %v555 = vld [vmem:[%s315 + $0x20] sm:$0xff]
        %v556 = vld [vmem:[%s315 + $0x28] sm:$0xff]
        %v557 = vld [vmem:[%s315 + $0x30] sm:$0xff]
        %v558 = vld [vmem:[%s315 + $0x38] sm:$0xff]
        %v559 = vld [vmem:[%s315 + $0x40] sm:$0xff]
        %v560 = vld [vmem:[%s315 + $0x48] sm:$0xff]
        %v561 = vld [vmem:[%s315 + $0x50] sm:$0xff]
        %v562 = vld [vmem:[%s315 + $0x58] sm:$0xff]
        %v563 = vld [vmem:[%s315 + $0x60] sm:$0xff]
        %v564 = vld [vmem:[%s315 + $0x68] sm:$0xff]
        %v565 = vld [vmem:[%s315 + $0x70] sm:$0xff]
        %v566 = vld [vmem:[%s315 + $0x78] sm:$0xff]
        %v567 = vld [vmem:[%s321] sm:$0xff]
        %v568 = vld [vmem:[%s321 + $0x8] sm:$0xff]
        %v569 = vld [vmem:[%s321 + $0x10] sm:$0xff]
        %v570 = vld [vmem:[%s321 + $0x18] sm:$0xff]
        %v571 = vld [vmem:[%s321 + $0x20] sm:$0xff]
        %v572 = vld [vmem:[%s321 + $0x28] sm:$0xff]
        %v573 = vld [vmem:[%s321 + $0x30] sm:$0xff]
        %v574 = vld [vmem:[%s321 + $0x38] sm:$0xff]
        %v575 = vld [vmem:[%s321 + $0x40] sm:$0xff]
        %v576 = vld [vmem:[%s321 + $0x48] sm:$0xff]
        %v577 = vld [vmem:[%s321 + $0x50] sm:$0xff]
        %v578 = vld [vmem:[%s321 + $0x58] sm:$0xff]
        %v579 = vld [vmem:[%s321 + $0x60] sm:$0xff]
        %v580 = vld [vmem:[%s321 + $0x68] sm:$0xff]
        %v581 = vld [vmem:[%s321 + $0x70] sm:$0xff]
        %v582 = vld [vmem:[%s321 + $0x78] sm:$0xff]
        %vm583 = vcmask 523264
        %v585 = vsel %vm583, %v551, 0
        %v588 = vsel %vm583, %v552, 0
        %v591 = vsel %vm583, %v553, 0
        %v594 = vsel %vm583, %v554, 0
        %v597 = vsel %vm583, %v555, 0
        %v600 = vsel %vm583, %v556, 0
        %v603 = vsel %vm583, %v557, 0
        %v606 = vsel %vm583, %v558, 0
        %v609 = vsel %vm583, %v559, 0
        %v612 = vsel %vm583, %v560, 0
        %v615 = vsel %vm583, %v561, 0
        %v618 = vsel %vm583, %v562, 0
        %v621 = vsel %vm583, %v563, 0
        %v624 = vsel %vm583, %v564, 0
        %v627 = vsel %vm583, %v565, 0
        %v630 = vsel %vm583, %v566, 0
        %v633 = vsel %vm583, %v567, 0
        %v636 = vsel %vm583, %v568, 0
        %v639 = vsel %vm583, %v569, 0
        %v642 = vsel %vm583, %v570, 0
        %v645 = vsel %vm583, %v571, 0
        %v648 = vsel %vm583, %v572, 0
        %v651 = vsel %vm583, %v573, 0
        %v654 = vsel %vm583, %v574, 0
        %v657 = vsel %vm583, %v575, 0
        %v660 = vsel %vm583, %v576, 0
        %v663 = vsel %vm583, %v577, 0
        %v666 = vsel %vm583, %v578, 0
        %v669 = vsel %vm583, %v579, 0
        %v672 = vsel %vm583, %v580, 0
        %v675 = vsel %vm583, %v581, 0
        %v678 = vsel %vm583, %v582, 0
        %680 = vmatprep.subr.mxu0 0.0
        %681 = vmatpush1.xpose.msra.mxu0 %v633
        %682 = vmatprep.subr.mxu0 0.0
        %683 = vmatpush1.xpose.msra.mxu0 %v636
        %684 = vmatprep.subr.mxu0 0.0
        %685 = vmatpush1.xpose.msra.mxu0 %v639
        %686 = vmatprep.subr.mxu0 0.0
        %687 = vmatpush1.xpose.msra.mxu0 %v642
        %688 = vmatprep.subr.mxu0 0.0
        %689 = vmatpush1.xpose.msra.mxu0 %v645
        %690 = vmatprep.subr.mxu0 0.0
        %691 = vmatpush1.xpose.msra.mxu0 %v648
        %692 = vmatprep.subr.mxu0 0.0
        %693 = vmatpush1.xpose.msra.mxu0 %v651
        %694 = vmatprep.subr.mxu0 0.0
        %695 = vmatpush1.xpose.msra.mxu0 %v654
        %696 = vmatprep.subr.mxu0 0.0
        %697 = vmatpush1.xpose.msra.mxu0 %v657
        %698 = vmatprep.subr.mxu0 0.0
        %699 = vmatpush1.xpose.msra.mxu0 %v660
        %700 = vmatprep.subr.mxu0 0.0
        %701 = vmatpush1.xpose.msra.mxu0 %v663
        %702 = vmatprep.subr.mxu0 0.0
        %703 = vmatpush1.xpose.msra.mxu0 %v666
        %704 = vmatprep.subr.mxu0 0.0
        %705 = vmatpush1.xpose.msra.mxu0 %v669
        %706 = vmatprep.subr.mxu0 0.0
        %707 = vmatpush1.xpose.msra.mxu0 %v672
        %708 = vmatprep.subr.mxu0 0.0
        %709 = vmatpush1.xpose.msra.mxu0 %v675
        %710 = vmatprep.subr.mxu0 0.0
        %711 = vmatpush1.xpose.msra.mxu0 %v678
        %712 = vmatprep.subr.mxu0 0.0
        %713 = vmatpush1.xpose.msra.mxu0 0.0
        %714 = vmatprep.subr.mxu0 0.0
        %715 = vmatpush1.xpose.msra.mxu0 0.0
        %716 = vmatprep.subr.mxu0 0.0
        %717 = vmatpush1.xpose.msra.mxu0 0.0
        %718 = vmatprep.subr.mxu0 0.0
        %719 = vmatpush1.xpose.msra.mxu0 0.0
        %720 = vmatprep.subr.mxu0 0.0
        %721 = vmatpush1.xpose.msra.mxu0 0.0
        %722 = vmatprep.subr.mxu0 0.0
        %723 = vmatpush1.xpose.msra.mxu0 0.0
        %724 = vmatprep.subr.mxu0 0.0
        %725 = vmatpush1.xpose.msra.mxu0 0.0
        %726 = vmatprep.subr.mxu0 0.0
        %727 = vmatpush1.xpose.msra.mxu0 0.0
        %728 = vmatprep.subr.mxu0 0.0
        %729 = vmatpush1.xpose.msra.mxu0 0.0
        %730 = vmatprep.subr.mxu0 0.0
        %731 = vmatpush1.xpose.msra.mxu0 0.0
        %732 = vmatprep.subr.mxu0 0.0
        %733 = vmatpush1.xpose.msra.mxu0 0.0
        %734 = vmatprep.subr.mxu0 0.0
        %735 = vmatpush1.xpose.msra.mxu0 0.0
        %736 = vmatprep.subr.mxu0 0.0
        %737 = vmatpush1.xpose.msra.mxu0 0.0
        %738 = vmatprep.subr.mxu0 0.0
        %739 = vmatpush1.xpose.msra.mxu0 0.0
        %740 = vmatprep.subr.mxu0 0.0
        %741 = vmatpush1.xpose.msra.mxu0 0.0
        %742 = vmatprep.subr.mxu0 0.0
        %743 = vmatpush1.xpose.msra.mxu0 0.0
        %744 = vmatprep.mubr.f32.mxu0 0.0
        %745 = vmatmul.mubr.f32.gmra.mrb[0].mxu0 %v585
        %v746 = vpop.f32.mrb[0].mxu0
        %v747 = vadd.f32 0.0, %v746
        %v748 = vpop.f32.mrb[0].mxu0
        %749 = vmatprep.mubr.f32.mxu0 0.0
        %750 = vmatmul.mubr.f32.gmra.mrb[0].mxu0 %v588
        %v751 = vpop.f32.mrb[0].mxu0
        %v752 = vadd.f32 0.0, %v751
        %v753 = vpop.f32.mrb[0].mxu0
        %754 = vmatprep.mubr.f32.mxu0 0.0
        %755 = vmatmul.mubr.f32.gmra.mrb[0].mxu0 %v591
        %v756 = vpop.f32.mrb[0].mxu0
        %v757 = vadd.f32 0.0, %v756
        %v758 = vpop.f32.mrb[0].mxu0
        %759 = vmatprep.mubr.f32.mxu0 0.0
        %760 = vmatmul.mubr.f32.gmra.mrb[0].mxu0 %v594
        %v761 = vpop.f32.mrb[0].mxu0
        %v762 = vadd.f32 0.0, %v761
        %v763 = vpop.f32.mrb[0].mxu0
        %764 = vmatprep.mubr.f32.mxu0 0.0
        %765 = vmatmul.mubr.f32.gmra.mrb[0].mxu0 %v597
        %v766 = vpop.f32.mrb[0].mxu0
        %v767 = vadd.f32 0.0, %v766
        %v768 = vpop.f32.mrb[0].mxu0
        %769 = vmatprep.mubr.f32.mxu0 0.0
        %770 = vmatmul.mubr.f32.gmra.mrb[0].mxu0 %v600
        %v771 = vpop.f32.mrb[0].mxu0
        %v772 = vadd.f32 0.0, %v771
        %v773 = vpop.f32.mrb[0].mxu0
        %774 = vmatprep.mubr.f32.mxu0 0.0
        %775 = vmatmul.mubr.f32.gmra.mrb[0].mxu0 %v603
        %v776 = vpop.f32.mrb[0].mxu0
        %v777 = vadd.f32 0.0, %v776
        %v778 = vpop.f32.mrb[0].mxu0
        %779 = vmatprep.mubr.f32.mxu0 0.0
        %780 = vmatmul.mubr.f32.gmra.mrb[0].mxu0 %v606
        %v781 = vpop.f32.mrb[0].mxu0
        %v782 = vadd.f32 0.0, %v781
        %v783 = vpop.f32.mrb[0].mxu0
        %784 = vmatprep.mubr.f32.mxu0 0.0
        %785 = vmatmul.mubr.f32.gmra.mrb[0].mxu0 %v609
        %v786 = vpop.f32.mrb[0].mxu0
        %v787 = vadd.f32 0.0, %v786
        %v788 = vpop.f32.mrb[0].mxu0
        %789 = vmatprep.mubr.f32.mxu0 0.0
        %790 = vmatmul.mubr.f32.gmra.mrb[0].mxu0 %v612
        %v791 = vpop.f32.mrb[0].mxu0
        %v792 = vadd.f32 0.0, %v791
        %v793 = vpop.f32.mrb[0].mxu0
        %794 = vmatprep.mubr.f32.mxu0 0.0
        %795 = vmatmul.mubr.f32.gmra.mrb[0].mxu0 %v615
        %v796 = vpop.f32.mrb[0].mxu0
        %v797 = vadd.f32 0.0, %v796
        %v798 = vpop.f32.mrb[0].mxu0
        %799 = vmatprep.mubr.f32.mxu0 0.0
        %800 = vmatmul.mubr.f32.gmra.mrb[0].mxu0 %v618
        %v801 = vpop.f32.mrb[0].mxu0
        %v802 = vadd.f32 0.0, %v801
        %v803 = vpop.f32.mrb[0].mxu0
        %804 = vmatprep.mubr.f32.mxu0 0.0
        %805 = vmatmul.mubr.f32.gmra.mrb[0].mxu0 %v621
        %v806 = vpop.f32.mrb[0].mxu0
        %v807 = vadd.f32 0.0, %v806
        %v808 = vpop.f32.mrb[0].mxu0
        %809 = vmatprep.mubr.f32.mxu0 0.0
        %810 = vmatmul.mubr.f32.gmra.mrb[0].mxu0 %v624
        %v811 = vpop.f32.mrb[0].mxu0
        %v812 = vadd.f32 0.0, %v811
        %v813 = vpop.f32.mrb[0].mxu0
        %814 = vmatprep.mubr.f32.mxu0 0.0
        %815 = vmatmul.mubr.f32.gmra.mrb[0].mxu0 %v627
        %v816 = vpop.f32.mrb[0].mxu0
        %v817 = vadd.f32 0.0, %v816
        %v818 = vpop.f32.mrb[0].mxu0
        %819 = vmatprep.mubr.f32.mxu0 0.0
        %820 = vmatmul.mubr.f32.gmra.mrb[0].mxu0 %v630
        %v821 = vpop.f32.mrb[0].mxu0
        %v822 = vadd.f32 0.0, %v821
        %v823 = vpop.f32.mrb[0].mxu0
        %824 = vdwg.mxu0
        %v825 = vstv %s341
        %v826 = vmul.f32 %v747, %v825
        %v827 = vmul.f32 %v752, %v825
        %v828 = vmul.f32 %v757, %v825
        %v829 = vmul.f32 %v762, %v825
        %v830 = vmul.f32 %v767, %v825
        %v831 = vmul.f32 %v772, %v825
        %v832 = vmul.f32 %v777, %v825
        %v833 = vmul.f32 %v782, %v825
        %v834 = vmul.f32 %v787, %v825
        %v835 = vmul.f32 %v792, %v825
        %v836 = vmul.f32 %v797, %v825
        %v837 = vmul.f32 %v802, %v825
        %v838 = vmul.f32 %v807, %v825
        %v839 = vmul.f32 %v812, %v825
        %v840 = vmul.f32 %v817, %v825
        %v841 = vmul.f32 %v822, %v825
        %v842 = vld [vmem:[#allocation3] sm:$0xff]
        %v843 = vld [vmem:[#allocation3 + $0x8] sm:$0xff]
        %v844 = vld [vmem:[#allocation3 + $0x10] sm:$0xff]
        %v845 = vld [vmem:[#allocation3 + $0x18] sm:$0xff]
        %v846 = vld [vmem:[#allocation3 + $0x20] sm:$0xff]
        %v847 = vld [vmem:[#allocation3 + $0x28] sm:$0xff]
        %v848 = vld [vmem:[#allocation3 + $0x30] sm:$0xff]
        %v849 = vld [vmem:[#allocation3 + $0x38] sm:$0xff]
        %v850 = vld [vmem:[#allocation3 + $0x40] sm:$0xff]
        %v851 = vld [vmem:[#allocation3 + $0x48] sm:$0xff]
        %v852 = vld [vmem:[#allocation3 + $0x50] sm:$0xff]
        %v853 = vld [vmem:[#allocation3 + $0x58] sm:$0xff]
        %v854 = vld [vmem:[#allocation3 + $0x60] sm:$0xff]
        %v855 = vld [vmem:[#allocation3 + $0x68] sm:$0xff]
        %v856 = vld [vmem:[#allocation3 + $0x70] sm:$0xff]
        %v857 = vld [vmem:[#allocation3 + $0x78] sm:$0xff]
        %858 = vmax.xlane.f32.xlu0 %v826
        %v859 = vpop.xlane.xlu0 %858
        %860 = vmax.xlane.f32.xlu0 %v827
        %v861 = vpop.xlane.xlu0 %860
        %862 = vmax.xlane.f32.xlu0 %v828
        %v863 = vpop.xlane.xlu0 %862
        %864 = vmax.xlane.f32.xlu0 %v829
        %v865 = vpop.xlane.xlu0 %864
        %866 = vmax.xlane.f32.xlu0 %v830
        %v867 = vpop.xlane.xlu0 %866
        %868 = vmax.xlane.f32.xlu0 %v831
        %v869 = vpop.xlane.xlu0 %868
        %870 = vmax.xlane.f32.xlu0 %v832
        %v871 = vpop.xlane.xlu0 %870
        %872 = vmax.xlane.f32.xlu0 %v833
        %v873 = vpop.xlane.xlu0 %872
        %874 = vmax.xlane.f32.xlu0 %v834
        %v875 = vpop.xlane.xlu0 %874
        %876 = vmax.xlane.f32.xlu0 %v835
        %v877 = vpop.xlane.xlu0 %876
        %878 = vmax.xlane.f32.xlu0 %v836
        %v879 = vpop.xlane.xlu0 %878
        %880 = vmax.xlane.f32.xlu0 %v837
        %v881 = vpop.xlane.xlu0 %880
        %882 = vmax.xlane.f32.xlu0 %v838
        %v883 = vpop.xlane.xlu0 %882
        %884 = vmax.xlane.f32.xlu0 %v839
        %v885 = vpop.xlane.xlu0 %884
        %886 = vmax.xlane.f32.xlu0 %v840
        %v887 = vpop.xlane.xlu0 %886
        %888 = vmax.xlane.f32.xlu0 %v841
        %v889 = vpop.xlane.xlu0 %888
        %v890 = vmax.f32 %v842, %v859
        %v891 = vmax.f32 %v843, %v861
        %v892 = vmax.f32 %v844, %v863
        %v893 = vmax.f32 %v845, %v865
        %v894 = vmax.f32 %v846, %v867
        %v895 = vmax.f32 %v847, %v869
        %v896 = vmax.f32 %v848, %v871
        %v897 = vmax.f32 %v849, %v873
        %v898 = vmax.f32 %v850, %v875
        %v899 = vmax.f32 %v851, %v877
        %v900 = vmax.f32 %v852, %v879
        %v901 = vmax.f32 %v853, %v881
        %v902 = vmax.f32 %v854, %v883
        %v903 = vmax.f32 %v855, %v885
        %v904 = vmax.f32 %v856, %v887
        %v905 = vmax.f32 %v857, %v889
        %907 = vset.pattern.permute.xlu0 0
        %908 = vperm.xlu0 %907, %v890
        %v909 = vpop.permute.xlu0 %908
        %912 = vset.pattern.permute.xlu0 0
        %913 = vperm.xlu0 %912, %v891
        %v914 = vpop.permute.xlu0 %913
        %917 = vset.pattern.permute.xlu0 0
        %918 = vperm.xlu0 %917, %v892
        %v919 = vpop.permute.xlu0 %918
        %922 = vset.pattern.permute.xlu0 0
        %923 = vperm.xlu0 %922, %v893
        %v924 = vpop.permute.xlu0 %923
        %927 = vset.pattern.permute.xlu0 0
        %928 = vperm.xlu0 %927, %v894
        %v929 = vpop.permute.xlu0 %928
        %932 = vset.pattern.permute.xlu0 0
        %933 = vperm.xlu0 %932, %v895
        %v934 = vpop.permute.xlu0 %933
        %937 = vset.pattern.permute.xlu0 0
        %938 = vperm.xlu0 %937, %v896
        %v939 = vpop.permute.xlu0 %938
        %942 = vset.pattern.permute.xlu0 0
        %943 = vperm.xlu0 %942, %v897
        %v944 = vpop.permute.xlu0 %943
        %947 = vset.pattern.permute.xlu0 0
        %948 = vperm.xlu0 %947, %v898
        %v949 = vpop.permute.xlu0 %948
        %952 = vset.pattern.permute.xlu0 0
        %953 = vperm.xlu0 %952, %v899
        %v954 = vpop.permute.xlu0 %953
        %957 = vset.pattern.permute.xlu0 0
        %958 = vperm.xlu0 %957, %v900
        %v959 = vpop.permute.xlu0 %958
        %962 = vset.pattern.permute.xlu0 0
        %963 = vperm.xlu0 %962, %v901
        %v964 = vpop.permute.xlu0 %963
        %967 = vset.pattern.permute.xlu0 0
        %968 = vperm.xlu0 %967, %v902
        %v969 = vpop.permute.xlu0 %968
        %972 = vset.pattern.permute.xlu0 0
        %973 = vperm.xlu0 %972, %v903
        %v974 = vpop.permute.xlu0 %973
        %977 = vset.pattern.permute.xlu0 0
        %978 = vperm.xlu0 %977, %v904
        %v979 = vpop.permute.xlu0 %978
        %982 = vset.pattern.permute.xlu0 0
        %983 = vperm.xlu0 %982, %v905
        %v984 = vpop.permute.xlu0 %983
        %v986 = vsub.f32 %v826, %v909
        %v987 = vsub.f32 %v827, %v914
        %v988 = vsub.f32 %v828, %v919
        %v989 = vsub.f32 %v829, %v924
        %v990 = vsub.f32 %v830, %v929
        %v991 = vsub.f32 %v831, %v934
        %v992 = vsub.f32 %v832, %v939
        %v993 = vsub.f32 %v833, %v944
        %v994 = vsub.f32 %v834, %v949
        %v995 = vsub.f32 %v835, %v954
        %v996 = vsub.f32 %v836, %v959
        %v997 = vsub.f32 %v837, %v964
        %v998 = vsub.f32 %v838, %v969
        %v999 = vsub.f32 %v839, %v974
        %v1000 = vsub.f32 %v840, %v979
        %v1001 = vsub.f32 %v841, %v984
        %v1002 = vmul.f32 %v986, 1.442695
        %v1003 = vpow.pop %v1002
        %v1004 = vmul.f32 %v987, 1.442695
        %v1005 = vpow.pop %v1004
        %v1006 = vmul.f32 %v988, 1.442695
        %v1007 = vpow.pop %v1006
        %v1008 = vmul.f32 %v989, 1.442695
        %v1009 = vpow.pop %v1008
        %v1010 = vmul.f32 %v990, 1.442695
        %v1011 = vpow.pop %v1010
        %v1012 = vmul.f32 %v991, 1.442695
        %v1013 = vpow.pop %v1012
        %v1014 = vmul.f32 %v992, 1.442695
        %v1015 = vpow.pop %v1014
        %v1016 = vmul.f32 %v993, 1.442695
        %v1017 = vpow.pop %v1016
        %v1018 = vmul.f32 %v994, 1.442695
        %v1019 = vpow.pop %v1018
        %v1020 = vmul.f32 %v995, 1.442695
        %v1021 = vpow.pop %v1020
        %v1022 = vmul.f32 %v996, 1.442695
        %v1023 = vpow.pop %v1022
        %v1024 = vmul.f32 %v997, 1.442695
        %v1025 = vpow.pop %v1024
        %v1026 = vmul.f32 %v998, 1.442695
        %v1027 = vpow.pop %v1026
        %v1028 = vmul.f32 %v999, 1.442695
        %v1029 = vpow.pop %v1028
        %v1030 = vmul.f32 %v1000, 1.442695
        %v1031 = vpow.pop %v1030
        %v1032 = vmul.f32 %v1001, 1.442695
        %v1033 = vpow.pop %v1032
        %v1034 = vld [vmem:[#allocation4] sm:$0xff]
        %v1035 = vld [vmem:[#allocation4 + $0x8] sm:$0xff]
        %v1036 = vld [vmem:[#allocation4 + $0x10] sm:$0xff]
        %v1037 = vld [vmem:[#allocation4 + $0x18] sm:$0xff]
        %v1038 = vld [vmem:[#allocation4 + $0x20] sm:$0xff]
        %v1039 = vld [vmem:[#allocation4 + $0x28] sm:$0xff]
        %v1040 = vld [vmem:[#allocation4 + $0x30] sm:$0xff]
        %v1041 = vld [vmem:[#allocation4 + $0x38] sm:$0xff]
        %v1042 = vld [vmem:[#allocation4 + $0x40] sm:$0xff]
        %v1043 = vld [vmem:[#allocation4 + $0x48] sm:$0xff]
        %v1044 = vld [vmem:[#allocation4 + $0x50] sm:$0xff]
        %v1045 = vld [vmem:[#allocation4 + $0x58] sm:$0xff]
        %v1046 = vld [vmem:[#allocation4 + $0x60] sm:$0xff]
        %v1047 = vld [vmem:[#allocation4 + $0x68] sm:$0xff]
        %v1048 = vld [vmem:[#allocation4 + $0x70] sm:$0xff]
        %v1049 = vld [vmem:[#allocation4 + $0x78] sm:$0xff]
        %v1050 = vsub.f32 %v842, %v890
        %v1051 = vsub.f32 %v843, %v891
        %v1052 = vsub.f32 %v844, %v892
        %v1053 = vsub.f32 %v845, %v893
        %v1054 = vsub.f32 %v846, %v894
        %v1055 = vsub.f32 %v847, %v895
        %v1056 = vsub.f32 %v848, %v896
        %v1057 = vsub.f32 %v849, %v897
        %v1058 = vsub.f32 %v850, %v898
        %v1059 = vsub.f32 %v851, %v899
        %v1060 = vsub.f32 %v852, %v900
        %v1061 = vsub.f32 %v853, %v901
        %v1062 = vsub.f32 %v854, %v902
        %v1063 = vsub.f32 %v855, %v903
        %v1064 = vsub.f32 %v856, %v904
        %v1065 = vsub.f32 %v857, %v905
        %v1066 = vmul.f32 %v1050, 1.442695
        %v1067 = vpow.pop %v1066
        %v1068 = vmul.f32 %v1051, 1.442695
        %v1069 = vpow.pop %v1068
        %v1070 = vmul.f32 %v1052, 1.442695
        %v1071 = vpow.pop %v1070
        %v1072 = vmul.f32 %v1053, 1.442695
        %v1073 = vpow.pop %v1072
        %v1074 = vmul.f32 %v1054, 1.442695
        %v1075 = vpow.pop %v1074
        %v1076 = vmul.f32 %v1055, 1.442695
        %v1077 = vpow.pop %v1076
        %v1078 = vmul.f32 %v1056, 1.442695
        %v1079 = vpow.pop %v1078
        %v1080 = vmul.f32 %v1057, 1.442695
        %v1081 = vpow.pop %v1080
        %v1082 = vmul.f32 %v1058, 1.442695
        %v1083 = vpow.pop %v1082
        %v1084 = vmul.f32 %v1059, 1.442695
        %v1085 = vpow.pop %v1084
        %v1086 = vmul.f32 %v1060, 1.442695
        %v1087 = vpow.pop %v1086
        %v1088 = vmul.f32 %v1061, 1.442695
        %v1089 = vpow.pop %v1088
        %v1090 = vmul.f32 %v1062, 1.442695
        %v1091 = vpow.pop %v1090
        %v1092 = vmul.f32 %v1063, 1.442695
        %v1093 = vpow.pop %v1092
        %v1094 = vmul.f32 %v1064, 1.442695
        %v1095 = vpow.pop %v1094
        %v1096 = vmul.f32 %v1065, 1.442695
        %v1097 = vpow.pop %v1096
        %v1098 = vmul.f32 %v1034, %v1067
        %v1099 = vmul.f32 %v1035, %v1069
        %v1100 = vmul.f32 %v1036, %v1071
        %v1101 = vmul.f32 %v1037, %v1073
        %v1102 = vmul.f32 %v1038, %v1075
        %v1103 = vmul.f32 %v1039, %v1077
        %v1104 = vmul.f32 %v1040, %v1079
        %v1105 = vmul.f32 %v1041, %v1081
        %v1106 = vmul.f32 %v1042, %v1083
        %v1107 = vmul.f32 %v1043, %v1085
        %v1108 = vmul.f32 %v1044, %v1087
        %v1109 = vmul.f32 %v1045, %v1089
        %v1110 = vmul.f32 %v1046, %v1091
        %v1111 = vmul.f32 %v1047, %v1093
        %v1112 = vmul.f32 %v1048, %v1095
        %v1113 = vmul.f32 %v1049, %v1097
        %1114 = vadd.xlane.f32.xlu0 %v1003
        %v1115 = vpop.xlane.xlu0 %1114
        %1116 = vadd.xlane.f32.xlu0 %v1005
        %v1117 = vpop.xlane.xlu0 %1116
        %1118 = vadd.xlane.f32.xlu0 %v1007
        %v1119 = vpop.xlane.xlu0 %1118
        %1120 = vadd.xlane.f32.xlu0 %v1009
        %v1121 = vpop.xlane.xlu0 %1120
        %1122 = vadd.xlane.f32.xlu0 %v1011
        %v1123 = vpop.xlane.xlu0 %1122
        %1124 = vadd.xlane.f32.xlu0 %v1013
        %v1125 = vpop.xlane.xlu0 %1124
        %1126 = vadd.xlane.f32.xlu0 %v1015
        %v1127 = vpop.xlane.xlu0 %1126
        %1128 = vadd.xlane.f32.xlu0 %v1017
        %v1129 = vpop.xlane.xlu0 %1128
        %1130 = vadd.xlane.f32.xlu0 %v1019
        %v1131 = vpop.xlane.xlu0 %1130
        %1132 = vadd.xlane.f32.xlu0 %v1021
        %v1133 = vpop.xlane.xlu0 %1132
        %1134 = vadd.xlane.f32.xlu0 %v1023
        %v1135 = vpop.xlane.xlu0 %1134
        %1136 = vadd.xlane.f32.xlu0 %v1025
        %v1137 = vpop.xlane.xlu0 %1136
        %1138 = vadd.xlane.f32.xlu0 %v1027
        %v1139 = vpop.xlane.xlu0 %1138
        %1140 = vadd.xlane.f32.xlu0 %v1029
        %v1141 = vpop.xlane.xlu0 %1140
        %1142 = vadd.xlane.f32.xlu0 %v1031
        %v1143 = vpop.xlane.xlu0 %1142
        %1144 = vadd.xlane.f32.xlu0 %v1033
        %v1145 = vpop.xlane.xlu0 %1144
        %v1146 = vadd.f32 %v1098, %v1115
        %v1147 = vadd.f32 %v1099, %v1117
        %v1148 = vadd.f32 %v1100, %v1119
        %v1149 = vadd.f32 %v1101, %v1121
        %v1150 = vadd.f32 %v1102, %v1123
        %v1151 = vadd.f32 %v1103, %v1125
        %v1152 = vadd.f32 %v1104, %v1127
        %v1153 = vadd.f32 %v1105, %v1129
        %v1154 = vadd.f32 %v1106, %v1131
        %v1155 = vadd.f32 %v1107, %v1133
        %v1156 = vadd.f32 %v1108, %v1135
        %v1157 = vadd.f32 %v1109, %v1137
        %v1158 = vadd.f32 %v1110, %v1139
        %v1159 = vadd.f32 %v1111, %v1141
        %v1160 = vadd.f32 %v1112, %v1143
        %v1161 = vadd.f32 %v1113, %v1145
        %vm1162 = vcmask 7168
        %1163 = vst.msk [vmem:[#allocation4] sm:$0xff] %vm1162, %v1146
        %1164 = vst.msk [vmem:[#allocation4 + $0x8] sm:$0xff] %vm1162, %v1147
        %1165 = vst.msk [vmem:[#allocation4 + $0x10] sm:$0xff] %vm1162, %v1148
        %1166 = vst.msk [vmem:[#allocation4 + $0x18] sm:$0xff] %vm1162, %v1149
        %1167 = vst.msk [vmem:[#allocation4 + $0x20] sm:$0xff] %vm1162, %v1150
        %1168 = vst.msk [vmem:[#allocation4 + $0x28] sm:$0xff] %vm1162, %v1151
        %1169 = vst.msk [vmem:[#allocation4 + $0x30] sm:$0xff] %vm1162, %v1152
        %1170 = vst.msk [vmem:[#allocation4 + $0x38] sm:$0xff] %vm1162, %v1153
        %1171 = vst.msk [vmem:[#allocation4 + $0x40] sm:$0xff] %vm1162, %v1154
        %1172 = vst.msk [vmem:[#allocation4 + $0x48] sm:$0xff] %vm1162, %v1155
        %1173 = vst.msk [vmem:[#allocation4 + $0x50] sm:$0xff] %vm1162, %v1156
        %1174 = vst.msk [vmem:[#allocation4 + $0x58] sm:$0xff] %vm1162, %v1157
        %1175 = vst.msk [vmem:[#allocation4 + $0x60] sm:$0xff] %vm1162, %v1158
        %1176 = vst.msk [vmem:[#allocation4 + $0x68] sm:$0xff] %vm1162, %v1159
        %1177 = vst.msk [vmem:[#allocation4 + $0x70] sm:$0xff] %vm1162, %v1160
        %1178 = vst.msk [vmem:[#allocation4 + $0x78] sm:$0xff] %vm1162, %v1161
        %1179 = vst.msk [vmem:[#allocation3] sm:$0xff] %vm1162, %v890
        %1180 = vst.msk [vmem:[#allocation3 + $0x8] sm:$0xff] %vm1162, %v891
        %1181 = vst.msk [vmem:[#allocation3 + $0x10] sm:$0xff] %vm1162, %v892
        %1182 = vst.msk [vmem:[#allocation3 + $0x18] sm:$0xff] %vm1162, %v893
        %1183 = vst.msk [vmem:[#allocation3 + $0x20] sm:$0xff] %vm1162, %v894
        %1184 = vst.msk [vmem:[#allocation3 + $0x28] sm:$0xff] %vm1162, %v895
        %1185 = vst.msk [vmem:[#allocation3 + $0x30] sm:$0xff] %vm1162, %v896
        %1186 = vst.msk [vmem:[#allocation3 + $0x38] sm:$0xff] %vm1162, %v897
        %1187 = vst.msk [vmem:[#allocation3 + $0x40] sm:$0xff] %vm1162, %v898
        %1188 = vst.msk [vmem:[#allocation3 + $0x48] sm:$0xff] %vm1162, %v899
        %1189 = vst.msk [vmem:[#allocation3 + $0x50] sm:$0xff] %vm1162, %v900
        %1190 = vst.msk [vmem:[#allocation3 + $0x58] sm:$0xff] %vm1162, %v901
        %1191 = vst.msk [vmem:[#allocation3 + $0x60] sm:$0xff] %vm1162, %v902
        %1192 = vst.msk [vmem:[#allocation3 + $0x68] sm:$0xff] %vm1162, %v903
        %1193 = vst.msk [vmem:[#allocation3 + $0x70] sm:$0xff] %vm1162, %v904
        %1194 = vst.msk [vmem:[#allocation3 + $0x78] sm:$0xff] %vm1162, %v905
        %s1195 = scalar_lea.vmem [#allocation5], %s24
        %v1196 = vld [vmem:[%s1195] sm:$0x1]
        %v1197 = vmax.f32 %v826, %v830
        %v1198 = vmax.f32 %v827, %v831
        %v1199 = vmax.f32 %v828, %v832
        %v1200 = vmax.f32 %v829, %v833
        %v1201 = vmax.f32 %v1197, %v834
        %v1202 = vmax.f32 %v1198, %v835
        %v1203 = vmax.f32 %v1199, %v836
        %v1204 = vmax.f32 %v1200, %v837
        %v1205 = vmax.f32 %v1201, %v838
        %v1206 = vmax.f32 %v1202, %v839
        %v1207 = vmax.f32 %v1203, %v840
        %v1208 = vmax.f32 %v1204, %v841
        %v1209 = vmax.f32 %v1205, %v1206
        %v1210 = vmax.f32 %v1207, %v1208
        %v1211 = vmax.f32 %v1209, %v1210
        %v1212 = vrot.slane %v1211, 4
        %v1213 = vmax.f32 %v1211, %v1212
        %v1214 = vrot.slane %v1213, 2
        %v1215 = vmax.f32 %v1213, %v1214
        %v1216 = vrot.slane %v1215, 1
        %v1217 = vmax.f32 %v1215, %v1216
        %v1218 = vmax.f32 %v1196, %v1217
        %v1220 = vlaneseq
        %v1221 = vshrl.u32 %v1220, 7
        %v1222 = vsub.s32 0, %v1221
        %v1223 = vrot.slane %v1218, %v1222
        %v1225 = vsub.f32 %v826, %v1223
        %v1226 = vsub.f32 %v827, %v1223
        %v1227 = vsub.f32 %v828, %v1223
        %v1228 = vsub.f32 %v829, %v1223
        %v1229 = vsub.f32 %v830, %v1223
        %v1230 = vsub.f32 %v831, %v1223
        %v1231 = vsub.f32 %v832, %v1223
        %v1232 = vsub.f32 %v833, %v1223
        %v1233 = vsub.f32 %v834, %v1223
        %v1234 = vsub.f32 %v835, %v1223
        %v1235 = vsub.f32 %v836, %v1223
        %v1236 = vsub.f32 %v837, %v1223
        %v1237 = vsub.f32 %v838, %v1223
        %v1238 = vsub.f32 %v839, %v1223
        %v1239 = vsub.f32 %v840, %v1223
        %v1240 = vsub.f32 %v841, %v1223
        %v1241 = vmul.f32 %v1225, 1.442695
        %v1242 = vpow.pop %v1241
        %v1243 = vmul.f32 %v1226, 1.442695
        %v1244 = vpow.pop %v1243
        %v1245 = vmul.f32 %v1227, 1.442695
        %v1246 = vpow.pop %v1245
        %v1247 = vmul.f32 %v1228, 1.442695
        %v1248 = vpow.pop %v1247
        %v1249 = vmul.f32 %v1229, 1.442695
        %v1250 = vpow.pop %v1249
        %v1251 = vmul.f32 %v1230, 1.442695
        %v1252 = vpow.pop %v1251
        %v1253 = vmul.f32 %v1231, 1.442695
        %v1254 = vpow.pop %v1253
        %v1255 = vmul.f32 %v1232, 1.442695
        %v1256 = vpow.pop %v1255
        %v1257 = vmul.f32 %v1233, 1.442695
        %v1258 = vpow.pop %v1257
        %v1259 = vmul.f32 %v1234, 1.442695
        %v1260 = vpow.pop %v1259
        %v1261 = vmul.f32 %v1235, 1.442695
        %v1262 = vpow.pop %v1261
        %v1263 = vmul.f32 %v1236, 1.442695
        %v1264 = vpow.pop %v1263
        %v1265 = vmul.f32 %v1237, 1.442695
        %v1266 = vpow.pop %v1265
        %v1267 = vmul.f32 %v1238, 1.442695
        %v1268 = vpow.pop %v1267
        %v1269 = vmul.f32 %v1239, 1.442695
        %v1270 = vpow.pop %v1269
        %v1271 = vmul.f32 %v1240, 1.442695
        %v1272 = vpow.pop %v1271
        %1273 = vmatprep.subr.mxu0 0.0
        %1274 = vmatpush1.msra.mxu0 %v1242
        %1275 = vmatprep.subr.mxu0 0.0
        %1276 = vmatpush1.msra.mxu0 %v1244
        %1277 = vmatprep.subr.mxu0 0.0
        %1278 = vmatpush1.msra.mxu0 %v1246
        %1279 = vmatprep.subr.mxu0 0.0
        %1280 = vmatpush1.msra.mxu0 %v1248
        %1281 = vmatprep.subr.mxu0 0.0
        %1282 = vmatpush1.msra.mxu0 %v1250
        %1283 = vmatprep.subr.mxu0 0.0
        %1284 = vmatpush1.msra.mxu0 %v1252
        %1285 = vmatprep.subr.mxu0 0.0
        %1286 = vmatpush1.msra.mxu0 %v1254
        %1287 = vmatprep.subr.mxu0 0.0
        %1288 = vmatpush1.msra.mxu0 %v1256
        %1289 = vmatprep.subr.mxu0 0.0
        %1290 = vmatpush1.msra.mxu0 %v1258
        %1291 = vmatprep.subr.mxu0 0.0
        %1292 = vmatpush1.msra.mxu0 %v1260
        %1293 = vmatprep.subr.mxu0 0.0
        %1294 = vmatpush1.msra.mxu0 %v1262
        %1295 = vmatprep.subr.mxu0 0.0
        %1296 = vmatpush1.msra.mxu0 %v1264
        %1297 = vmatprep.subr.mxu0 0.0
        %1298 = vmatpush1.msra.mxu0 %v1266
        %1299 = vmatprep.subr.mxu0 0.0
        %1300 = vmatpush1.msra.mxu0 %v1268
        %1301 = vmatprep.subr.mxu0 0.0
        %1302 = vmatpush1.msra.mxu0 %v1270
        %1303 = vmatprep.subr.mxu0 0.0
        %1304 = vmatpush1.msra.mxu0 %v1272
        %1305 = vmatprep.subr.mxu0 0.0
        %1306 = vmatpush1.msra.mxu0 0.0
        %1307 = vmatprep.subr.mxu0 0.0
        %1308 = vmatpush1.msra.mxu0 0.0
        %1309 = vmatprep.subr.mxu0 0.0
        %1310 = vmatpush1.msra.mxu0 0.0
        %1311 = vmatprep.subr.mxu0 0.0
        %1312 = vmatpush1.msra.mxu0 0.0
        %1313 = vmatprep.subr.mxu0 0.0
        %1314 = vmatpush1.msra.mxu0 0.0
        %1315 = vmatprep.subr.mxu0 0.0
        %1316 = vmatpush1.msra.mxu0 0.0
        %1317 = vmatprep.subr.mxu0 0.0
        %1318 = vmatpush1.msra.mxu0 0.0
        %1319 = vmatprep.subr.mxu0 0.0
        %1320 = vmatpush1.msra.mxu0 0.0
        %1321 = vmatprep.subr.mxu0 0.0
        %1322 = vmatpush1.msra.mxu0 0.0
        %1323 = vmatprep.subr.mxu0 0.0
        %1324 = vmatpush1.msra.mxu0 0.0
        %1325 = vmatprep.subr.mxu0 0.0
        %1326 = vmatpush1.msra.mxu0 0.0
        %1327 = vmatprep.subr.mxu0 0.0
        %1328 = vmatpush1.msra.mxu0 0.0
        %1329 = vmatprep.subr.mxu0 0.0
        %1330 = vmatpush1.msra.mxu0 0.0
        %1331 = vmatprep.subr.mxu0 0.0
        %1332 = vmatpush1.msra.mxu0 0.0
        %1333 = vmatprep.subr.mxu0 0.0
        %1334 = vmatpush1.msra.mxu0 0.0
        %1335 = vmatprep.subr.mxu0 0.0
        %1336 = vmatpush1.msra.mxu0 0.0
        %1337 = vmatprep.mubr.f32.mxu0 0.0
        %1338 = vmatmul.mubr.f32.gmra.mrb[0].mxu0 1.0
        %v1339 = vpop.f32.mrb[0].mxu0
        %v1340 = vadd.f32 0.0, %v1339
        %v1341 = vpop.f32.mrb[0].mxu0
        %1342 = vdwg.mxu0
        %s1343 = scalar_lea.vmem [#allocation6], %s24
        %v1344 = vld [vmem:[%s1343] sm:$0x1]
        %v1345 = vsub.f32 %v1196, %v1218
        %v1346 = vmul.f32 %v1345, 1.442695
        %v1347 = vpow.pop %v1346
        %v1348 = vmul.f32 %v1344, %v1347
        %v1349 = vadd.f32 %v1348, %v1340
        %1350 = vst [vmem:[%s1343] sm:$0x1] %v1349
        %1351 = vst [vmem:[%s1195] sm:$0x1] %v1218
        %p1352 = scmp.eq.s32.totalorder %s24, 1
        // Predicated region
        $region53: #{tpu_custom_call.1} parent=43 // pred_check
          %p1353 = pneg %p1352
        $region54: #{tpu_custom_call.1} parent=43 // pred_check_branch
          %1355 = sbr.rel (%p1353) target = $region56
        $region55: #{tpu_custom_call.1} parent=43 // pred_region
          %v1356 = vld [vmem:[#allocation3] sm:$0xff]
          %v1357 = vld [vmem:[#allocation3 + $0x8] sm:$0xff]
          %v1358 = vld [vmem:[#allocation3 + $0x10] sm:$0xff]
          %v1359 = vld [vmem:[#allocation3 + $0x18] sm:$0xff]
          %v1360 = vld [vmem:[#allocation3 + $0x20] sm:$0xff]
          %v1361 = vld [vmem:[#allocation3 + $0x28] sm:$0xff]
          %v1362 = vld [vmem:[#allocation3 + $0x30] sm:$0xff]
          %v1363 = vld [vmem:[#allocation3 + $0x38] sm:$0xff]
          %v1364 = vld [vmem:[#allocation3 + $0x40] sm:$0xff]
          %v1365 = vld [vmem:[#allocation3 + $0x48] sm:$0xff]
          %v1366 = vld [vmem:[#allocation3 + $0x50] sm:$0xff]
          %v1367 = vld [vmem:[#allocation3 + $0x58] sm:$0xff]
          %v1368 = vld [vmem:[#allocation3 + $0x60] sm:$0xff]
          %v1369 = vld [vmem:[#allocation3 + $0x68] sm:$0xff]
          %v1370 = vld [vmem:[#allocation3 + $0x70] sm:$0xff]
          %v1371 = vld [vmem:[#allocation3 + $0x78] sm:$0xff]
          %v1372 = vld [vmem:[#allocation4] sm:$0xff]
          %v1373 = vld [vmem:[#allocation4 + $0x8] sm:$0xff]
          %v1374 = vld [vmem:[#allocation4 + $0x10] sm:$0xff]
          %v1375 = vld [vmem:[#allocation4 + $0x18] sm:$0xff]
          %v1376 = vld [vmem:[#allocation4 + $0x20] sm:$0xff]
          %v1377 = vld [vmem:[#allocation4 + $0x28] sm:$0xff]
          %v1378 = vld [vmem:[#allocation4 + $0x30] sm:$0xff]
          %v1379 = vld [vmem:[#allocation4 + $0x38] sm:$0xff]
          %v1380 = vld [vmem:[#allocation4 + $0x40] sm:$0xff]
          %v1381 = vld [vmem:[#allocation4 + $0x48] sm:$0xff]
          %v1382 = vld [vmem:[#allocation4 + $0x50] sm:$0xff]
          %v1383 = vld [vmem:[#allocation4 + $0x58] sm:$0xff]
          %v1384 = vld [vmem:[#allocation4 + $0x60] sm:$0xff]
          %v1385 = vld [vmem:[#allocation4 + $0x68] sm:$0xff]
          %v1386 = vld [vmem:[#allocation4 + $0x70] sm:$0xff]
          %v1387 = vld [vmem:[#allocation4 + $0x78] sm:$0xff]
          %v1388 = vlog2.pop %v1372
          %v1389 = vmul.f32 %v1388, 0.6931472
          %v1390 = vlog2.pop %v1373
          %v1391 = vmul.f32 %v1390, 0.6931472
          %v1392 = vlog2.pop %v1374
          %v1393 = vmul.f32 %v1392, 0.6931472
          %v1394 = vlog2.pop %v1375
          %v1395 = vmul.f32 %v1394, 0.6931472
          %v1396 = vlog2.pop %v1376
          %v1397 = vmul.f32 %v1396, 0.6931472
          %v1398 = vlog2.pop %v1377
          %v1399 = vmul.f32 %v1398, 0.6931472
          %v1400 = vlog2.pop %v1378
          %v1401 = vmul.f32 %v1400, 0.6931472
          %v1402 = vlog2.pop %v1379
          %v1403 = vmul.f32 %v1402, 0.6931472
          %v1404 = vlog2.pop %v1380
          %v1405 = vmul.f32 %v1404, 0.6931472
          %v1406 = vlog2.pop %v1381
          %v1407 = vmul.f32 %v1406, 0.6931472
          %v1408 = vlog2.pop %v1382
          %v1409 = vmul.f32 %v1408, 0.6931472
          %v1410 = vlog2.pop %v1383
          %v1411 = vmul.f32 %v1410, 0.6931472
          %v1412 = vlog2.pop %v1384
          %v1413 = vmul.f32 %v1412, 0.6931472
          %v1414 = vlog2.pop %v1385
          %v1415 = vmul.f32 %v1414, 0.6931472
          %v1416 = vlog2.pop %v1386
          %v1417 = vmul.f32 %v1416, 0.6931472
          %v1418 = vlog2.pop %v1387
          %v1419 = vmul.f32 %v1418, 0.6931472
          %v1420 = vadd.f32 %v1356, %v1389
          %v1421 = vadd.f32 %v1357, %v1391
          %v1422 = vadd.f32 %v1358, %v1393
          %v1423 = vadd.f32 %v1359, %v1395
          %v1424 = vadd.f32 %v1360, %v1397
          %v1425 = vadd.f32 %v1361, %v1399
          %v1426 = vadd.f32 %v1362, %v1401
          %v1427 = vadd.f32 %v1363, %v1403
          %v1428 = vadd.f32 %v1364, %v1405
          %v1429 = vadd.f32 %v1365, %v1407
          %v1430 = vadd.f32 %v1366, %v1409
          %v1431 = vadd.f32 %v1367, %v1411
          %v1432 = vadd.f32 %v1368, %v1413
          %v1433 = vadd.f32 %v1369, %v1415
          %v1434 = vadd.f32 %v1370, %v1417
          %v1435 = vadd.f32 %v1371, %v1419
          %v1436 = vld [vmem:[#allocation2] sm:$0x1]
          %v1437 = vsel %vm1162, %v1420, 0.0
          %v1438 = vsel %vm1162, %v1421, 0.0
          %v1439 = vadd.f32 %v1437, %v1438
          %v1440 = vsel %vm1162, %v1422, 0.0
          %v1441 = vadd.f32 %v1439, %v1440
          %v1442 = vsel %vm1162, %v1423, 0.0
          %v1443 = vadd.f32 %v1441, %v1442
          %v1444 = vsel %vm1162, %v1424, 0.0
          %v1445 = vadd.f32 %v1443, %v1444
          %v1446 = vsel %vm1162, %v1425, 0.0
          %v1447 = vadd.f32 %v1445, %v1446
          %v1448 = vsel %vm1162, %v1426, 0.0
          %v1449 = vadd.f32 %v1447, %v1448
          %v1450 = vsel %vm1162, %v1427, 0.0
          %v1451 = vadd.f32 %v1449, %v1450
          %v1452 = vsel %vm1162, %v1428, 0.0
          %v1453 = vadd.f32 %v1451, %v1452
          %v1454 = vsel %vm1162, %v1429, 0.0
          %v1455 = vadd.f32 %v1453, %v1454
          %v1456 = vsel %vm1162, %v1430, 0.0
          %v1457 = vadd.f32 %v1455, %v1456
          %v1458 = vsel %vm1162, %v1431, 0.0
          %v1459 = vadd.f32 %v1457, %v1458
          %v1460 = vsel %vm1162, %v1432, 0.0
          %v1461 = vadd.f32 %v1459, %v1460
          %v1462 = vsel %vm1162, %v1433, 0.0
          %v1463 = vadd.f32 %v1461, %v1462
          %v1464 = vsel %vm1162, %v1434, 0.0
          %v1465 = vadd.f32 %v1463, %v1464
          %v1466 = vsel %vm1162, %v1435, 0.0
          %v1467 = vadd.f32 %v1465, %v1466
          %1468 = vadd.xlane.f32.xlu0 %v1467
          %v1469 = vpop.xlane.xlu0 %1468
          %v1470 = vrot.slane %v1469, 4
          %v1471 = vadd.f32 %v1469, %v1470
          %v1472 = vrot.slane %v1471, 2
          %v1473 = vadd.f32 %v1471, %v1472
          %v1474 = vrot.slane %v1473, 1
          %v1475 = vadd.f32 %v1473, %v1474
          %s1476 = vtos %v1475
          %v1477 = vstv %s1476
          %v1478 = vmul.f32 %v1477, 0.001953125
          %v1479 = vadd.f32 %v1436, %v1478
          %vm1480 = vcmask 0
          %1481 = vst.msk [vmem:[#allocation2] sm:$0x1] %vm1480, %v1479
        $region56: #{tpu_custom_call.1} parent=43 // pred_fallthru
          _
        %p1482 = scmp.eq.s32.totalorder %s23, 1
        // Predicated region
        $region57: #{tpu_custom_call.1} parent=43 // pred_check
          %p1483 = pneg %p1482
        $region58: #{tpu_custom_call.1} parent=43 // pred_check_branch
          %1485 = sbr.rel (%p1483) target = $region60
        $region59: #{tpu_custom_call.1} parent=43 // pred_region
          %v1486 = vld [vmem:[%s1195] sm:$0x1]
          %v1487 = vld [vmem:[%s1343] sm:$0x1]
          %v1488 = vlog2.pop %v1487
          %v1489 = vmul.f32 %v1488, 0.6931472
          %v1490 = vadd.f32 %v1486, %v1489
          %v1491 = vld [vmem:[#allocation2] sm:$0x1]
          %vm1492 = vcmask 1040384
          %v1493 = vsel %vm1492, %v1490, 0.0
          %1494 = vadd.xlane.f32.xlu0 %v1493
          %v1495 = vpop.xlane.xlu0 %1494
          %v1496 = vrot.slane %v1495, 4
          %v1497 = vadd.f32 %v1495, %v1496
          %v1498 = vrot.slane %v1497, 2
          %v1499 = vadd.f32 %v1497, %v1498
          %v1500 = vrot.slane %v1499, 1
          %v1501 = vadd.f32 %v1499, %v1500
          %s1502 = vtos %v1501
          %v1503 = vstv %s1502
          %v1504 = vmul.f32 %v1503, 0.001953125
          %v1505 = vadd.f32 %v1491, %v1504
          %vm1506 = vcmask 0
          %1507 = vst.msk [vmem:[#allocation2] sm:$0x1] %vm1506, %v1505
        $region60: #{tpu_custom_call.1} parent=43 // pred_fallthru
          _
        %p1508 = pnand %p1482, %p1352
        %p1509 = pneg %p1508
        // Predicated region
        $region61: #{tpu_custom_call.1} parent=43 // pred_check
          _
        $region62: #{tpu_custom_call.1} parent=43 // pred_check_branch
          %1511 = sbr.rel (%p1508) target = $region64
        $region63: #{tpu_custom_call.1} parent=43 // pred_region
          %v1512 = vld [vmem:[#allocation2] sm:$0x1]
          %vm1513 = vcmask 0
          %1514 = vst.msk [vmem:[#allocation8] sm:$0x1] %vm1513, %v1512
        $region64: #{tpu_custom_call.1} parent=43 // pred_fallthru
          _
        // Predicated region
        $region65: #{tpu_custom_call.1} parent=43 // pred_check
          %p1515 = pneg %p195
        $region66: #{tpu_custom_call.1} parent=43 // pred_check_branch
          %1517 = sbr.rel (%p1515) target = $region68
        $region67: #{tpu_custom_call.1} parent=43 // pred_region
          %s1519 = ssub.s32 16, 16
          %1520 = vsyncadd [#allocation9], %s1519
          %s1522 = sshll.u32 [#allocation8], 4
          %s1523 = int_to_ptr.vmem [resolvable:$true] %s1522
          %1525 = dma.vmem_to_hbm [thread:$0]  %s1523, 16, %s6, [#allocation9]
        $region68: #{tpu_custom_call.1} parent=43 // pred_fallthru
          _
        // Predicated region
        $region69: #{tpu_custom_call.1} parent=43 // pred_check
          %p1526 = pneg %p195
        $region70: #{tpu_custom_call.1} parent=43 // pred_check_branch
          %1528 = sbr.rel (%p1526) target = $region72
        $region71: #{tpu_custom_call.1} parent=43 // pred_region
          %1529 = dma.done [#allocation9], 16
        $region72: #{tpu_custom_call.1} parent=43 // pred_fallthru
          _
      $region44: #{tpu_custom_call.1} parent=5 // pred_fallthru
        _
      %p1530 = scmp.le.s32.totalorder 2, %s14
      // Predicated region
      $region73: #{tpu_custom_call.1} parent=5 // pred_check
        %p1531 = pneg %p1530
      $region74: #{tpu_custom_call.1} parent=5 // pred_check_branch
        %1533 = sbr.rel (%p1531) target = $region76
      $region75: #{tpu_custom_call.1} parent=5 // pred_region
        %s1534 = ssub.s32 %s14, 2
      $region76: #{tpu_custom_call.1} parent=5 // pred_fallthru
        _
    $region6: #{tpu_custom_call.1} parent=1 // loop_footer
      %s18 = sadd.s32 1, %s14
    $region7: #{tpu_custom_call.1} parent=1 // loop_footer_branch
      %13 = sbr.rel target = $region3
    $region8: #{tpu_custom_call.1} parent=1 // loop_exit
      _
    %1535 = vsyncpa [#allocation9], 1
    %s1536 = scalar_lea.sflag [#allocation9], 1
    %1537 = vsyncpa %s1536, 1

</llo_original>
